<compile_context>
chip_gen: v6e
topology: v6e:2x2x1
jax: 0.10.0
libtpu: 0.0.40
codegen_flags: <defaults>
</compile_context>

<pallas_src>
import math

import jax
import jax.numpy as jnp
from jax.experimental import pallas as pl
from jax.experimental.pallas import tpu as pltpu

# ----------------------------- synthetic config ------------------------------
B = 2              # batch
S_FULL = 18        # subword sequence length incl. [CLS] and [SEP]
S = S_FULL - 2     # subword sequence length after stripping [CLS]/[SEP]
D = 32             # bert hidden size
NUM_HEADS = 2
HEAD_DIM = D // NUM_HEADS
F = 64             # FFN intermediate size
W = 8              # word-token sequence length (each word = 2 subwords, 'mean' pooling)
H_OUT = 48         # config.hidden_size (projection output)
VOCAB = 100
LN_EPS = 1e-12
M = B * S_FULL     # folded (batch*seq) rows


def _layer_norm(x, g, b, eps=LN_EPS):
    mu = jnp.mean(x, axis=-1, keepdims=True)
    var = jnp.mean((x - mu) ** 2, axis=-1, keepdims=True)
    return (x - mu) * jax.lax.rsqrt(var + eps) * g + b


# --------------------------- fused Pallas kernel ------------------------------
def fused_encoder_kernel(x_ref, bias_ref, wqkv_ref, bqkv_ref, wo_ref, slab_ref,
                         w1_ref, b1_ref, w2_ref, wp_ref, bp_ref,
                         pool_ref, cls_sel_ref,
                         tok_ref, cls_ref):
    x = x_ref[...]                                   # (M, D) f32
    bias = bias_ref[...]                             # (M, M) additive attention bias
    slab = slab_ref[...]                             # (6, D) packed small params
    bo = slab[0:1, :]
    ln1g = slab[1:2, :]
    ln1b = slab[2:3, :]
    b2 = slab[3:4, :]
    ln2g = slab[4:5, :]
    ln2b = slab[5:6, :]

    # ---- fused QKV projection (scale already folded into the Q columns) ----
    qkv = jnp.dot(x.astype(jnp.bfloat16), wqkv_ref[...],
                  preferred_element_type=jnp.float32) + bqkv_ref[...]   # (M, 3D) f32

    # ---- multi-head masked attention over the folded rows ----
    head_ctx = []
    for h in range(NUM_HEADS):                       # static loop, NUM_HEADS=2
        qh = qkv[:, h * HEAD_DIM:(h + 1) * HEAD_DIM].astype(jnp.bfloat16)
        kh = qkv[:, D + h * HEAD_DIM:D + (h + 1) * HEAD_DIM].astype(jnp.bfloat16)
        vh = qkv[:, 2 * D + h * HEAD_DIM:2 * D + (h + 1) * HEAD_DIM].astype(jnp.bfloat16)
        # scores with rhs contracted on its last dim (no explicit transpose)
        s = jax.lax.dot_general(qh, kh, (((1,), (1,)), ((), ())),
                                preferred_element_type=jnp.float32)     # (M, M)
        s = s + bias
        s = s - jnp.max(s, axis=-1, keepdims=True)
        p = jnp.exp(s)
        p = p * pl.reciprocal(jnp.sum(p, axis=-1, keepdims=True), approx=True)
        head_ctx.append(jnp.dot(p.astype(jnp.bfloat16), vh,
                                preferred_element_type=jnp.float32))    # (M, HEAD_DIM)
    ctx = jnp.concatenate(head_ctx, axis=-1)                            # (M, D)

    # ---- output projection + residual + LayerNorm ----
    attn_out = jnp.dot(ctx.astype(jnp.bfloat16), wo_ref[...],
                       preferred_element_type=jnp.float32) + bo
    h1 = _layer_norm(x + attn_out, ln1g, ln1b)

    # ---- GELU FFN + residual + LayerNorm ----
    ff = jnp.dot(h1.astype(jnp.bfloat16), w1_ref[...],
                 preferred_element_type=jnp.float32) + b1_ref[...]
    ff = jax.nn.gelu(ff, approximate=True)
    ff = jnp.dot(ff.astype(jnp.bfloat16), w2_ref[...],
                 preferred_element_type=jnp.float32) + b2
    h2 = _layer_norm(h1 + ff, ln2g, ln2b)                               # (M, D) f32

    # ---- fused epilogue: projection, then block-diagonal mean pooling ----
    # (pool @ emb) @ Wp == pool @ (emb @ Wp); keep the 16-row matmul last.
    proj = jnp.dot(h2.astype(jnp.bfloat16), wp_ref[...],
                   preferred_element_type=jnp.float32)                  # (M, H_OUT)
    tok_ref[...] = jnp.dot(pool_ref[...], proj,
                           preferred_element_type=jnp.float32) + bp_ref[...]  # (B*W, H_OUT)
    # CLS extraction as a tiny one-hot matmul (exact, f32)
    cls_ref[...] = jnp.dot(cls_sel_ref[...], h2,
                           preferred_element_type=jnp.float32)          # (B, D)


# ------------------------------- wrapper ---------------------------------------
def run_fused_encoder(x_flat, attn_bias, wqkv, bqkv, wo, slab, w1, b1, w2, wp, bp,
                      pool_flat, cls_sel):
    def full(a):
        nd = a.ndim
        return pl.BlockSpec(a.shape, lambda i, nd=nd: (0,) * nd)

    ins = (x_flat, attn_bias, wqkv, bqkv, wo, slab, w1, b1, w2, wp, bp,
           pool_flat, cls_sel)
    return pl.pallas_call(
        fused_encoder_kernel,
        out_shape=(jax.ShapeDtypeStruct((B * W, H_OUT), jnp.float32),
                   jax.ShapeDtypeStruct((B, D), jnp.float32)),
        grid=(1,),
        in_specs=[full(a) for a in ins],
        out_specs=(pl.BlockSpec((B * W, H_OUT), lambda i: (0, 0)),
                   pl.BlockSpec((B, D), lambda i: (0, 0))),
        compiler_params=pltpu.CompilerParams(dimension_semantics=("arbitrary",)),
    )(*ins)


# --------------------------- forward (module semantics) -----------------------
def transformer_encoder_hf_prompt_forward(input_ids, attn_mask, params):
    """Mirrors TransformerEncoderHFPrompt.forward with use_prompt=False and
    subtoken_pooling='mean'. Returns the same dict structure."""
    (embed_table,
     wq, bq, wk, bk, wv, bv, wo, bo, ln1g, ln1b, w1, b1, w2, b2, ln2g, ln2b,
     wp, bp) = params

    # --- tokenizer-equivalent glue: embedding lookup (subword embeddings) ---
    x = jnp.take(embed_table, input_ids, axis=0)                  # (B, S_FULL, D)
    x_flat = x.reshape(M, D)
    mask_f = attn_mask.astype(jnp.float32)                        # (B, S_FULL)

    # --- block-diagonal additive attention bias over the folded row axis ---
    batch_id = jnp.repeat(jnp.arange(B), S_FULL)                  # (M,)
    same_batch = batch_id[:, None] == batch_id[None, :]           # (M, M)
    key_valid = mask_f.reshape(-1) > 0.0                          # (M,)
    attn_bias = jnp.where(same_batch & key_valid[None, :], 0.0, -1e9).astype(jnp.float32)

    # --- fuse QKV weights; fold 1/sqrt(head_dim) into Q; pack small params ---
    scale = 1.0 / math.sqrt(HEAD_DIM)
    wqkv = jnp.concatenate([wq * scale, wk, wv], axis=1).astype(jnp.bfloat16)  # (D, 3D)
    bqkv = jnp.concatenate([bq * scale, bk, bv], axis=1)                       # (1, 3D) f32
    slab = jnp.concatenate([bo, ln1g, ln1b, b2, ln2g, ln2b], axis=0)           # (6, D) f32

    # --- vectorized subtoken-pooler glue ---------------------------------------
    # synthetic w2sw_map (deterministic): word i <- stripped subwords [2i, 2i+1]
    masks = attn_mask[:, 1:-1]                                     # (B, S)
    word_of_sub = jnp.arange(S) // 2                               # (S,)
    assign = (word_of_sub[None, :] == jnp.arange(W)[:, None]).astype(jnp.float32)  # (W, S)
    counts = assign.sum(axis=-1)                                   # (W,)
    covered = jnp.einsum('ws,bs->bw', assign, masks.astype(jnp.float32))
    valid = covered >= counts[None, :]                             # all subwords unmasked
    token_masks = valid.astype(jnp.int32)                          # (B, W)
    weights = jnp.where(valid, 1.0 / jnp.maximum(counts[None, :], 1.0), 0.0)   # (B, W)
    pool_strip = assign[None, :, :] * weights[:, :, None]          # (B, W, S)
    pool_full = jnp.pad(pool_strip, ((0, 0), (0, 0), (1, 1)))      # (B, W, S_FULL), zero CLS/SEP
    # block-diagonal pooling matrix over the folded row axis
    pool_flat = jnp.einsum('bws,bc->bwcs', pool_full,
                           jnp.eye(B, dtype=jnp.float32)).reshape(B * W, M)

    # one-hot CLS row selector over the folded row axis
    cls_sel = (jnp.arange(B)[:, None] * S_FULL ==
               jnp.arange(M)[None, :]).astype(jnp.float32)         # (B, M)

    # --- single fused Pallas call (encoder layer + pooling + projection) ---
    tok_flat, cls_reps = run_fused_encoder(
        x_flat, attn_bias, wqkv, bqkv,
        wo.astype(jnp.bfloat16), slab,
        w1.astype(jnp.bfloat16), b1, w2.astype(jnp.bfloat16),
        wp.astype(jnp.bfloat16), bp,
        pool_flat, cls_sel)

    token_reps = tok_flat.reshape(B, W, H_OUT)

    # subtoken_pooling != 'none' -> w2sw_map=None and make_sw_span_ids returns None
    return dict(token_reps=token_reps,
                token_masks=token_masks,
                span_type_reps=None,
                rel_type_reps=None,
                cls_reps=cls_reps,
                sw_span_ids=None,
                w2sw_map=None)


# ------------------------------- parameter init --------------------------------
def init_params(key):
    ks = jax.random.split(key, 8)
    n = lambda k, shape, s=0.02: (jax.random.normal(k, shape, jnp.float32) * s)
    embed_table = n(ks[0], (VOCAB, D))
    wq, bq = n(ks[1], (D, D)), jnp.zeros((1, D), jnp.float32)
    wk, bk = n(ks[2], (D, D)), jnp.zeros((1, D), jnp.float32)
    wv, bv = n(ks[3], (D, D)), jnp.zeros((1, D), jnp.float32)
    wo, bo = n(ks[4], (D, D)), jnp.zeros((1, D), jnp.float32)
    ln1g, ln1b = jnp.ones((1, D), jnp.float32), jnp.zeros((1, D), jnp.float32)
    w1, b1 = n(ks[5], (D, F)), jnp.zeros((1, F), jnp.float32)
    w2, b2 = n(ks[6], (F, D)), jnp.zeros((1, D), jnp.float32)
    ln2g, ln2b = jnp.ones((1, D), jnp.float32), jnp.zeros((1, D), jnp.float32)
    wp, bp = n(ks[7], (D, H_OUT)), jnp.zeros((1, H_OUT), jnp.float32)
    return (embed_table,
            wq, bq, wk, bk, wv, bv, wo, bo, ln1g, ln1b, w1, b1, w2, b2, ln2g, ln2b,
            wp, bp)


if __name__ == "__main__":
    key = jax.random.PRNGKey(0)
    pkey, ikey = jax.random.split(key)
    params = init_params(pkey)

    # deterministic synthetic subword ids ([CLS]=1 at pos 0, [SEP]=2 at last pos)
    input_ids = jax.random.randint(ikey, (B, S_FULL), 3, VOCAB, dtype=jnp.int32)
    input_ids = input_ids.at[:, 0].set(1).at[:, -1].set(2)

    # attention mask: second example has its last 3 subwords padded
    attn_mask = jnp.ones((B, S_FULL), jnp.int32)
    attn_mask = attn_mask.at[1, -3:].set(0)

    out = transformer_encoder_hf_prompt_forward(input_ids, attn_mask, params)
    jax.block_until_ready(out["token_reps"])
    jax.block_until_ready(out["cls_reps"])
    jax.block_until_ready(out["token_masks"])

    assert out["token_reps"].shape == (B, W, H_OUT)
    assert out["token_masks"].shape == (B, W)
    assert out["cls_reps"].shape == (B, D)
    print("KERNEL_OK")
</pallas_src>

<mosaic_0001>
module attributes {stable_mosaic.version = 11 : i64} {
  func.func @fused_encoder_kernel(%arg0: i32, %arg1: memref<36x32xf32, #tpu.memory_space<vmem>>, %arg2: memref<36x36xf32, #tpu.memory_space<vmem>>, %arg3: memref<32x96xbf16, #tpu.memory_space<vmem>>, %arg4: memref<1x96xf32, #tpu.memory_space<vmem>>, %arg5: memref<32x32xbf16, #tpu.memory_space<vmem>>, %arg6: memref<6x32xf32, #tpu.memory_space<vmem>>, %arg7: memref<32x64xbf16, #tpu.memory_space<vmem>>, %arg8: memref<1x64xf32, #tpu.memory_space<vmem>>, %arg9: memref<64x32xbf16, #tpu.memory_space<vmem>>, %arg10: memref<32x48xbf16, #tpu.memory_space<vmem>>, %arg11: memref<1x48xf32, #tpu.memory_space<vmem>>, %arg12: memref<16x36xf32, #tpu.memory_space<vmem>>, %arg13: memref<2x36xf32, #tpu.memory_space<vmem>>, %arg14: memref<16x48xf32, #tpu.memory_space<vmem>>, %arg15: memref<2x32xf32, #tpu.memory_space<vmem>>) attributes {dimension_semantics = [#tpu.dimension_semantics<arbitrary>], iteration_bounds = array<i64: 1>, scalar_prefetch = 0 : i64, scratch_operands = 0 : i64, tpu.core_type = #tpu.core_type<tc>, window_params = [{pipeline_mode = #tpu.pipeline_mode<synchronous>, transform_indices = @transform_0, window_bounds = array<i64: 36, 32>}, {pipeline_mode = #tpu.pipeline_mode<synchronous>, transform_indices = @transform_1, window_bounds = array<i64: 36, 36>}, {pipeline_mode = #tpu.pipeline_mode<synchronous>, transform_indices = @transform_2, window_bounds = array<i64: 32, 96>}, {pipeline_mode = #tpu.pipeline_mode<synchronous>, transform_indices = @transform_3, window_bounds = array<i64: 1, 96>}, {pipeline_mode = #tpu.pipeline_mode<synchronous>, transform_indices = @transform_4, window_bounds = array<i64: 32, 32>}, {pipeline_mode = #tpu.pipeline_mode<synchronous>, transform_indices = @transform_5, window_bounds = array<i64: 6, 32>}, {pipeline_mode = #tpu.pipeline_mode<synchronous>, transform_indices = @transform_6, window_bounds = array<i64: 32, 64>}, {pipeline_mode = #tpu.pipeline_mode<synchronous>, transform_indices = @transform_7, window_bounds = array<i64: 1, 64>}, {pipeline_mode = #tpu.pipeline_mode<synchronous>, transform_indices = @transform_8, window_bounds = array<i64: 64, 32>}, {pipeline_mode = #tpu.pipeline_mode<synchronous>, transform_indices = @transform_9, window_bounds = array<i64: 32, 48>}, {pipeline_mode = #tpu.pipeline_mode<synchronous>, transform_indices = @transform_10, window_bounds = array<i64: 1, 48>}, {pipeline_mode = #tpu.pipeline_mode<synchronous>, transform_indices = @transform_11, window_bounds = array<i64: 16, 36>}, {pipeline_mode = #tpu.pipeline_mode<synchronous>, transform_indices = @transform_12, window_bounds = array<i64: 2, 36>}, {pipeline_mode = #tpu.pipeline_mode<synchronous>, transform_indices = @transform_13, window_bounds = array<i64: 16, 48>}, {pipeline_mode = #tpu.pipeline_mode<synchronous>, transform_indices = @transform_14, window_bounds = array<i64: 2, 32>}]} {
    %c0 = arith.constant 0 : index
    %c0_0 = arith.constant 0 : index
    %0 = vector.load %arg1[%c0, %c0_0] : memref<36x32xf32, #tpu.memory_space<vmem>>, vector<36x32xf32>
    %c0_1 = arith.constant 0 : index
    %c0_2 = arith.constant 0 : index
    %1 = vector.load %arg2[%c0_1, %c0_2] : memref<36x36xf32, #tpu.memory_space<vmem>>, vector<36x36xf32>
    %c0_3 = arith.constant 0 : index
    %c0_4 = arith.constant 0 : index
    %2 = vector.load %arg6[%c0_3, %c0_4] : memref<6x32xf32, #tpu.memory_space<vmem>>, vector<6x32xf32>
    %3 = vector.extract_strided_slice %2 {offsets = [0, 0], sizes = [1, 32], strides = [1, 1]} : vector<6x32xf32> to vector<1x32xf32>
    %4 = vector.extract_strided_slice %2 {offsets = [1, 0], sizes = [1, 32], strides = [1, 1]} : vector<6x32xf32> to vector<1x32xf32>
    %5 = vector.extract_strided_slice %2 {offsets = [2, 0], sizes = [1, 32], strides = [1, 1]} : vector<6x32xf32> to vector<1x32xf32>
    %6 = vector.extract_strided_slice %2 {offsets = [3, 0], sizes = [1, 32], strides = [1, 1]} : vector<6x32xf32> to vector<1x32xf32>
    %7 = vector.extract_strided_slice %2 {offsets = [4, 0], sizes = [1, 32], strides = [1, 1]} : vector<6x32xf32> to vector<1x32xf32>
    %8 = vector.extract_strided_slice %2 {offsets = [5, 0], sizes = [1, 32], strides = [1, 1]} : vector<6x32xf32> to vector<1x32xf32>
    %9 = arith.truncf %0 : vector<36x32xf32> to vector<36x32xbf16>
    %c0_5 = arith.constant 0 : index
    %c0_6 = arith.constant 0 : index
    %10 = vector.load %arg3[%c0_5, %c0_6] : memref<32x96xbf16, #tpu.memory_space<vmem>>, vector<32x96xbf16>
    %cst = arith.constant dense<0.000000e+00> : vector<36x96xf32>
    %11 = tpu.matmul %9, %10, %cst {dimension_numbers = #tpu.dot_dimension_numbers<[1], [0], [0], [1], [0, 0, 1, 1], [], []>} : vector<36x32xbf16>, vector<32x96xbf16>, vector<36x96xf32> -> vector<36x96xf32>
    %c0_7 = arith.constant 0 : index
    %c0_8 = arith.constant 0 : index
    %12 = vector.load %arg4[%c0_7, %c0_8] : memref<1x96xf32, #tpu.memory_space<vmem>>, vector<1x96xf32>
    %13 = vector.broadcast %12 : vector<1x96xf32> to vector<36x96xf32>
    %14 = arith.addf %11, %13 : vector<36x96xf32>
    %15 = vector.extract_strided_slice %14 {offsets = [0, 0], sizes = [36, 16], strides = [1, 1]} : vector<36x96xf32> to vector<36x16xf32>
    %16 = arith.truncf %15 : vector<36x16xf32> to vector<36x16xbf16>
    %17 = vector.extract_strided_slice %14 {offsets = [0, 32], sizes = [36, 16], strides = [1, 1]} : vector<36x96xf32> to vector<36x16xf32>
    %18 = arith.truncf %17 : vector<36x16xf32> to vector<36x16xbf16>
    %19 = vector.extract_strided_slice %14 {offsets = [0, 64], sizes = [36, 16], strides = [1, 1]} : vector<36x96xf32> to vector<36x16xf32>
    %20 = arith.truncf %19 : vector<36x16xf32> to vector<36x16xbf16>
    %cst_9 = arith.constant dense<0.000000e+00> : vector<36x36xf32>
    %21 = tpu.matmul %16, %18, %cst_9 {dimension_numbers = #tpu.dot_dimension_numbers<[1], [1], [0], [0], [0, 0, 1, 0], [], []>} : vector<36x16xbf16>, vector<36x16xbf16>, vector<36x36xf32> -> vector<36x36xf32>
    %22 = arith.addf %21, %1 : vector<36x36xf32>
    %cst_10 = arith.constant dense<0xFF800000> : vector<36xf32>
    %23 = vector.multi_reduction <maximumf>, %22, %cst_10 [1] : vector<36x36xf32> to vector<36xf32>
    %24 = vector.shape_cast %23 : vector<36xf32> to vector<36x1xf32>
    %25 = vector.broadcast %24 : vector<36x1xf32> to vector<36x36xf32>
    %26 = arith.subf %22, %25 : vector<36x36xf32>
    %27 = math.exp %26 : vector<36x36xf32>
    %cst_11 = arith.constant dense<0.000000e+00> : vector<36xf32>
    %28 = vector.multi_reduction <add>, %27, %cst_11 [1] : vector<36x36xf32> to vector<36xf32>
    %29 = vector.shape_cast %28 : vector<36xf32> to vector<36x1xf32>
    %30 = tpu.reciprocal %29 {approx = true} : vector<36x1xf32> -> vector<36x1xf32>
    %31 = vector.broadcast %30 : vector<36x1xf32> to vector<36x36xf32>
    %32 = arith.mulf %27, %31 : vector<36x36xf32>
    %33 = arith.truncf %32 : vector<36x36xf32> to vector<36x36xbf16>
    %cst_12 = arith.constant dense<0.000000e+00> : vector<36x16xf32>
    %34 = tpu.matmul %33, %20, %cst_12 {dimension_numbers = #tpu.dot_dimension_numbers<[1], [0], [0], [1], [0, 0, 1, 1], [], []>} : vector<36x36xbf16>, vector<36x16xbf16>, vector<36x16xf32> -> vector<36x16xf32>
    %35 = vector.extract_strided_slice %14 {offsets = [0, 16], sizes = [36, 16], strides = [1, 1]} : vector<36x96xf32> to vector<36x16xf32>
    %36 = arith.truncf %35 : vector<36x16xf32> to vector<36x16xbf16>
    %37 = vector.extract_strided_slice %14 {offsets = [0, 48], sizes = [36, 16], strides = [1, 1]} : vector<36x96xf32> to vector<36x16xf32>
    %38 = arith.truncf %37 : vector<36x16xf32> to vector<36x16xbf16>
    %39 = vector.extract_strided_slice %14 {offsets = [0, 80], sizes = [36, 16], strides = [1, 1]} : vector<36x96xf32> to vector<36x16xf32>
    %40 = arith.truncf %39 : vector<36x16xf32> to vector<36x16xbf16>
    %cst_13 = arith.constant dense<0.000000e+00> : vector<36x36xf32>
    %41 = tpu.matmul %36, %38, %cst_13 {dimension_numbers = #tpu.dot_dimension_numbers<[1], [1], [0], [0], [0, 0, 1, 0], [], []>} : vector<36x16xbf16>, vector<36x16xbf16>, vector<36x36xf32> -> vector<36x36xf32>
    %42 = arith.addf %41, %1 : vector<36x36xf32>
    %cst_14 = arith.constant dense<0xFF800000> : vector<36xf32>
    %43 = vector.multi_reduction <maximumf>, %42, %cst_14 [1] : vector<36x36xf32> to vector<36xf32>
    %44 = vector.shape_cast %43 : vector<36xf32> to vector<36x1xf32>
    %45 = vector.broadcast %44 : vector<36x1xf32> to vector<36x36xf32>
    %46 = arith.subf %42, %45 : vector<36x36xf32>
    %47 = math.exp %46 : vector<36x36xf32>
    %cst_15 = arith.constant dense<0.000000e+00> : vector<36xf32>
    %48 = vector.multi_reduction <add>, %47, %cst_15 [1] : vector<36x36xf32> to vector<36xf32>
    %49 = vector.shape_cast %48 : vector<36xf32> to vector<36x1xf32>
    %50 = tpu.reciprocal %49 {approx = true} : vector<36x1xf32> -> vector<36x1xf32>
    %51 = vector.broadcast %50 : vector<36x1xf32> to vector<36x36xf32>
    %52 = arith.mulf %47, %51 : vector<36x36xf32>
    %53 = arith.truncf %52 : vector<36x36xf32> to vector<36x36xbf16>
    %cst_16 = arith.constant dense<0.000000e+00> : vector<36x16xf32>
    %54 = tpu.matmul %53, %40, %cst_16 {dimension_numbers = #tpu.dot_dimension_numbers<[1], [0], [0], [1], [0, 0, 1, 1], [], []>} : vector<36x36xbf16>, vector<36x16xbf16>, vector<36x16xf32> -> vector<36x16xf32>
    %55 = tpu.concatenate %34, %54 in 1 : vector<36x16xf32>, vector<36x16xf32> -> vector<36x32xf32>
    %56 = arith.truncf %55 : vector<36x32xf32> to vector<36x32xbf16>
    %c0_17 = arith.constant 0 : index
    %c0_18 = arith.constant 0 : index
    %57 = vector.load %arg5[%c0_17, %c0_18] : memref<32x32xbf16, #tpu.memory_space<vmem>>, vector<32x32xbf16>
    %cst_19 = arith.constant dense<0.000000e+00> : vector<36x32xf32>
    %58 = tpu.matmul %56, %57, %cst_19 {dimension_numbers = #tpu.dot_dimension_numbers<[1], [0], [0], [1], [0, 0, 1, 1], [], []>} : vector<36x32xbf16>, vector<32x32xbf16>, vector<36x32xf32> -> vector<36x32xf32>
    %59 = vector.broadcast %3 : vector<1x32xf32> to vector<36x32xf32>
    %60 = arith.addf %58, %59 : vector<36x32xf32>
    %61 = arith.addf %0, %60 : vector<36x32xf32>
    %cst_20 = arith.constant dense<0.000000e+00> : vector<36xf32>
    %62 = vector.multi_reduction <add>, %61, %cst_20 [1] : vector<36x32xf32> to vector<36xf32>
    %63 = vector.shape_cast %62 : vector<36xf32> to vector<36x1xf32>
    %cst_21 = arith.constant 3.200000e+01 : f32
    %64 = vector.broadcast %cst_21 : f32 to vector<36x1xf32>
    %65 = arith.divf %63, %64 : vector<36x1xf32>
    %66 = vector.broadcast %65 : vector<36x1xf32> to vector<36x32xf32>
    %67 = arith.subf %61, %66 : vector<36x32xf32>
    %68 = arith.mulf %67, %67 : vector<36x32xf32>
    %cst_22 = arith.constant dense<0.000000e+00> : vector<36xf32>
    %69 = vector.multi_reduction <add>, %68, %cst_22 [1] : vector<36x32xf32> to vector<36xf32>
    %70 = vector.shape_cast %69 : vector<36xf32> to vector<36x1xf32>
    %cst_23 = arith.constant 3.200000e+01 : f32
    %71 = vector.broadcast %cst_23 : f32 to vector<36x1xf32>
    %72 = arith.divf %70, %71 : vector<36x1xf32>
    %73 = vector.broadcast %65 : vector<36x1xf32> to vector<36x32xf32>
    %74 = arith.subf %61, %73 : vector<36x32xf32>
    %cst_24 = arith.constant 9.99999996E-13 : f32
    %75 = vector.broadcast %cst_24 : f32 to vector<36x1xf32>
    %76 = arith.addf %72, %75 : vector<36x1xf32>
    %77 = math.rsqrt %76 : vector<36x1xf32>
    %78 = vector.broadcast %77 : vector<36x1xf32> to vector<36x32xf32>
    %79 = arith.mulf %74, %78 : vector<36x32xf32>
    %80 = vector.broadcast %4 : vector<1x32xf32> to vector<36x32xf32>
    %81 = arith.mulf %79, %80 : vector<36x32xf32>
    %82 = vector.broadcast %5 : vector<1x32xf32> to vector<36x32xf32>
    %83 = arith.addf %81, %82 : vector<36x32xf32>
    %84 = arith.truncf %83 : vector<36x32xf32> to vector<36x32xbf16>
    %c0_25 = arith.constant 0 : index
    %c0_26 = arith.constant 0 : index
    %85 = vector.load %arg7[%c0_25, %c0_26] : memref<32x64xbf16, #tpu.memory_space<vmem>>, vector<32x64xbf16>
    %cst_27 = arith.constant dense<0.000000e+00> : vector<36x64xf32>
    %86 = tpu.matmul %84, %85, %cst_27 {dimension_numbers = #tpu.dot_dimension_numbers<[1], [0], [0], [1], [0, 0, 1, 1], [], []>} : vector<36x32xbf16>, vector<32x64xbf16>, vector<36x64xf32> -> vector<36x64xf32>
    %c0_28 = arith.constant 0 : index
    %c0_29 = arith.constant 0 : index
    %87 = vector.load %arg8[%c0_28, %c0_29] : memref<1x64xf32, #tpu.memory_space<vmem>>, vector<1x64xf32>
    %88 = vector.broadcast %87 : vector<1x64xf32> to vector<36x64xf32>
    %89 = arith.addf %86, %88 : vector<36x64xf32>
    %90 = arith.mulf %89, %89 : vector<36x64xf32>
    %91 = arith.mulf %89, %90 : vector<36x64xf32>
    %cst_30 = arith.constant 4.471500e-02 : f32
    %92 = vector.broadcast %cst_30 : f32 to vector<36x64xf32>
    %93 = arith.mulf %92, %91 : vector<36x64xf32>
    %94 = arith.addf %89, %93 : vector<36x64xf32>
    %cst_31 = arith.constant 0.797884583 : f32
    %95 = vector.broadcast %cst_31 : f32 to vector<36x64xf32>
    %96 = arith.mulf %95, %94 : vector<36x64xf32>
    %97 = math.tanh %96 : vector<36x64xf32>
    %cst_32 = arith.constant 1.000000e+00 : f32
    %98 = vector.broadcast %cst_32 : f32 to vector<36x64xf32>
    %99 = arith.addf %98, %97 : vector<36x64xf32>
    %cst_33 = arith.constant 5.000000e-01 : f32
    %100 = vector.broadcast %cst_33 : f32 to vector<36x64xf32>
    %101 = arith.mulf %100, %99 : vector<36x64xf32>
    %102 = arith.mulf %89, %101 : vector<36x64xf32>
    %103 = arith.truncf %102 : vector<36x64xf32> to vector<36x64xbf16>
    %c0_34 = arith.constant 0 : index
    %c0_35 = arith.constant 0 : index
    %104 = vector.load %arg9[%c0_34, %c0_35] : memref<64x32xbf16, #tpu.memory_space<vmem>>, vector<64x32xbf16>
    %cst_36 = arith.constant dense<0.000000e+00> : vector<36x32xf32>
    %105 = tpu.matmul %103, %104, %cst_36 {dimension_numbers = #tpu.dot_dimension_numbers<[1], [0], [0], [1], [0, 0, 1, 1], [], []>} : vector<36x64xbf16>, vector<64x32xbf16>, vector<36x32xf32> -> vector<36x32xf32>
    %106 = vector.broadcast %6 : vector<1x32xf32> to vector<36x32xf32>
    %107 = arith.addf %105, %106 : vector<36x32xf32>
    %108 = arith.addf %83, %107 : vector<36x32xf32>
    %cst_37 = arith.constant dense<0.000000e+00> : vector<36xf32>
    %109 = vector.multi_reduction <add>, %108, %cst_37 [1] : vector<36x32xf32> to vector<36xf32>
    %110 = vector.shape_cast %109 : vector<36xf32> to vector<36x1xf32>
    %cst_38 = arith.constant 3.200000e+01 : f32
    %111 = vector.broadcast %cst_38 : f32 to vector<36x1xf32>
    %112 = arith.divf %110, %111 : vector<36x1xf32>
    %113 = vector.broadcast %112 : vector<36x1xf32> to vector<36x32xf32>
    %114 = arith.subf %108, %113 : vector<36x32xf32>
    %115 = arith.mulf %114, %114 : vector<36x32xf32>
    %cst_39 = arith.constant dense<0.000000e+00> : vector<36xf32>
    %116 = vector.multi_reduction <add>, %115, %cst_39 [1] : vector<36x32xf32> to vector<36xf32>
    %117 = vector.shape_cast %116 : vector<36xf32> to vector<36x1xf32>
    %cst_40 = arith.constant 3.200000e+01 : f32
    %118 = vector.broadcast %cst_40 : f32 to vector<36x1xf32>
    %119 = arith.divf %117, %118 : vector<36x1xf32>
    %120 = vector.broadcast %112 : vector<36x1xf32> to vector<36x32xf32>
    %121 = arith.subf %108, %120 : vector<36x32xf32>
    %cst_41 = arith.constant 9.99999996E-13 : f32
    %122 = vector.broadcast %cst_41 : f32 to vector<36x1xf32>
    %123 = arith.addf %119, %122 : vector<36x1xf32>
    %124 = math.rsqrt %123 : vector<36x1xf32>
    %125 = vector.broadcast %124 : vector<36x1xf32> to vector<36x32xf32>
    %126 = arith.mulf %121, %125 : vector<36x32xf32>
    %127 = vector.broadcast %7 : vector<1x32xf32> to vector<36x32xf32>
    %128 = arith.mulf %126, %127 : vector<36x32xf32>
    %129 = vector.broadcast %8 : vector<1x32xf32> to vector<36x32xf32>
    %130 = arith.addf %128, %129 : vector<36x32xf32>
    %131 = arith.truncf %130 : vector<36x32xf32> to vector<36x32xbf16>
    %c0_42 = arith.constant 0 : index
    %c0_43 = arith.constant 0 : index
    %132 = vector.load %arg10[%c0_42, %c0_43] : memref<32x48xbf16, #tpu.memory_space<vmem>>, vector<32x48xbf16>
    %cst_44 = arith.constant dense<0.000000e+00> : vector<36x48xf32>
    %133 = tpu.matmul %131, %132, %cst_44 {dimension_numbers = #tpu.dot_dimension_numbers<[1], [0], [0], [1], [0, 0, 1, 1], [], []>} : vector<36x32xbf16>, vector<32x48xbf16>, vector<36x48xf32> -> vector<36x48xf32>
    %c0_45 = arith.constant 0 : index
    %c0_46 = arith.constant 0 : index
    %134 = vector.load %arg12[%c0_45, %c0_46] : memref<16x36xf32, #tpu.memory_space<vmem>>, vector<16x36xf32>
    %cst_47 = arith.constant dense<0.000000e+00> : vector<16x48xf32>
    %135 = tpu.matmul %134, %133, %cst_47 {dimension_numbers = #tpu.dot_dimension_numbers<[1], [0], [0], [1], [0, 0, 1, 1], [], []>} : vector<16x36xf32>, vector<36x48xf32>, vector<16x48xf32> -> vector<16x48xf32>
    %c0_48 = arith.constant 0 : index
    %c0_49 = arith.constant 0 : index
    %136 = vector.load %arg11[%c0_48, %c0_49] : memref<1x48xf32, #tpu.memory_space<vmem>>, vector<1x48xf32>
    %137 = vector.broadcast %136 : vector<1x48xf32> to vector<16x48xf32>
    %138 = arith.addf %135, %137 : vector<16x48xf32>
    %c0_50 = arith.constant 0 : index
    %c0_51 = arith.constant 0 : index
    %139 = vector.load %arg14[%c0_50, %c0_51] : memref<16x48xf32, #tpu.memory_space<vmem>>, vector<16x48xf32>
    tpu.vector_store %arg14[%c0_50, %c0_51], %138 {strides = array<i32>} : memref<16x48xf32, #tpu.memory_space<vmem>>, vector<16x48xf32>,
    %c0_52 = arith.constant 0 : index
    %c0_53 = arith.constant 0 : index
    %140 = vector.load %arg13[%c0_52, %c0_53] : memref<2x36xf32, #tpu.memory_space<vmem>>, vector<2x36xf32>
    %cst_54 = arith.constant dense<0.000000e+00> : vector<2x32xf32>
    %141 = tpu.matmul %140, %130, %cst_54 {dimension_numbers = #tpu.dot_dimension_numbers<[1], [0], [0], [1], [0, 0, 1, 1], [], []>} : vector<2x36xf32>, vector<36x32xf32>, vector<2x32xf32> -> vector<2x32xf32>
    %c0_55 = arith.constant 0 : index
    %c0_56 = arith.constant 0 : index
    %142 = vector.load %arg15[%c0_55, %c0_56] : memref<2x32xf32, #tpu.memory_space<vmem>>, vector<2x32xf32>
    tpu.vector_store %arg15[%c0_55, %c0_56], %141 {strides = array<i32>} : memref<2x32xf32, #tpu.memory_space<vmem>>, vector<2x32xf32>,
    return
  }
  func.func @transform_0(%arg0: i32) -> (i32, i32) {
    %c0_i32 = arith.constant 0 : i32
    %c0_i32_0 = arith.constant 0 : i32
    %c0_i32_1 = arith.constant 0 : i32
    return %c0_i32, %c0_i32_0 : i32, i32
  }
  func.func @transform_1(%arg0: i32) -> (i32, i32) {
    %c0_i32 = arith.constant 0 : i32
    %c0_i32_0 = arith.constant 0 : i32
    %c0_i32_1 = arith.constant 0 : i32
    return %c0_i32, %c0_i32_0 : i32, i32
  }
  func.func @transform_2(%arg0: i32) -> (i32, i32) {
    %c0_i32 = arith.constant 0 : i32
    %c0_i32_0 = arith.constant 0 : i32
    %c0_i32_1 = arith.constant 0 : i32
    return %c0_i32, %c0_i32_0 : i32, i32
  }
  func.func @transform_3(%arg0: i32) -> (i32, i32) {
    %c0_i32 = arith.constant 0 : i32
    %c0_i32_0 = arith.constant 0 : i32
    %c0_i32_1 = arith.constant 0 : i32
    return %c0_i32, %c0_i32_0 : i32, i32
  }
  func.func @transform_4(%arg0: i32) -> (i32, i32) {
    %c0_i32 = arith.constant 0 : i32
    %c0_i32_0 = arith.constant 0 : i32
    %c0_i32_1 = arith.constant 0 : i32
    return %c0_i32, %c0_i32_0 : i32, i32
  }
  func.func @transform_5(%arg0: i32) -> (i32, i32) {
    %c0_i32 = arith.constant 0 : i32
    %c0_i32_0 = arith.constant 0 : i32
    %c0_i32_1 = arith.constant 0 : i32
    return %c0_i32, %c0_i32_0 : i32, i32
  }
  func.func @transform_6(%arg0: i32) -> (i32, i32) {
    %c0_i32 = arith.constant 0 : i32
    %c0_i32_0 = arith.constant 0 : i32
    %c0_i32_1 = arith.constant 0 : i32
    return %c0_i32, %c0_i32_0 : i32, i32
  }
  func.func @transform_7(%arg0: i32) -> (i32, i32) {
    %c0_i32 = arith.constant 0 : i32
    %c0_i32_0 = arith.constant 0 : i32
    %c0_i32_1 = arith.constant 0 : i32
    return %c0_i32, %c0_i32_0 : i32, i32
  }
  func.func @transform_8(%arg0: i32) -> (i32, i32) {
    %c0_i32 = arith.constant 0 : i32
    %c0_i32_0 = arith.constant 0 : i32
    %c0_i32_1 = arith.constant 0 : i32
    return %c0_i32, %c0_i32_0 : i32, i32
  }
  func.func @transform_9(%arg0: i32) -> (i32, i32) {
    %c0_i32 = arith.constant 0 : i32
    %c0_i32_0 = arith.constant 0 : i32
    %c0_i32_1 = arith.constant 0 : i32
    return %c0_i32, %c0_i32_0 : i32, i32
  }
  func.func @transform_10(%arg0: i32) -> (i32, i32) {
    %c0_i32 = arith.constant 0 : i32
    %c0_i32_0 = arith.constant 0 : i32
    %c0_i32_1 = arith.constant 0 : i32
    return %c0_i32, %c0_i32_0 : i32, i32
  }
  func.func @transform_11(%arg0: i32) -> (i32, i32) {
    %c0_i32 = arith.constant 0 : i32
    %c0_i32_0 = arith.constant 0 : i32
    %c0_i32_1 = arith.constant 0 : i32
    return %c0_i32, %c0_i32_0 : i32, i32
  }
  func.func @transform_12(%arg0: i32) -> (i32, i32) {
    %c0_i32 = arith.constant 0 : i32
    %c0_i32_0 = arith.constant 0 : i32
    %c0_i32_1 = arith.constant 0 : i32
    return %c0_i32, %c0_i32_0 : i32, i32
  }
  func.func @transform_13(%arg0: i32) -> (i32, i32) {
    %c0_i32 = arith.constant 0 : i32
    %c0_i32_0 = arith.constant 0 : i32
    %c0_i32_1 = arith.constant 0 : i32
    return %c0_i32, %c0_i32_0 : i32, i32
  }
  func.func @transform_14(%arg0: i32) -> (i32, i32) {
    %c0_i32 = arith.constant 0 : i32
    %c0_i32_0 = arith.constant 0 : i32
    %c0_i32_1 = arith.constant 0 : i32
    return %c0_i32, %c0_i32_0 : i32, i32
  }
}

</mosaic_0001>

<llo_original>
// kernel: tpu_custom_call.1
$region0: #{tpu_custom_call.1}
  #allocation0 [shape = 'u32[]', space=smem, size = 0x4, offset = 0x4, fixed_abs, tag = 'smem constant byte address 0x4 - core index']
  #allocation1 [shape = 'u32[144,128]{1,0:T(1,128)}', space=vmem, size = 0x12000, scoped, tag = 'internal scratch']
  %s0 = inlined_call_operand.vmem [shape: f32[36,32], index: 0, kind: input, shape index: {}]
  %s1 = inlined_call_operand.vmem [shape: f32[36,36], index: 1, kind: input, shape index: {}]
  %s2 = inlined_call_operand.vmem [shape: bf16[32,96], index: 2, kind: input, shape index: {}]
  %s3 = inlined_call_operand.hbm [shape: f32[1,96], index: 3, kind: input, shape index: {}]
  %s4 = inlined_call_operand.vmem [shape: bf16[32,32], index: 4, kind: input, shape index: {}]
  %s5 = inlined_call_operand.hbm [shape: f32[6,32], index: 5, kind: input, shape index: {}]
  %s6 = inlined_call_operand.vmem [shape: bf16[32,64], index: 6, kind: input, shape index: {}]
  %s7 = inlined_call_operand.hbm [shape: f32[1,64], index: 7, kind: input, shape index: {}]
  %s8 = inlined_call_operand.vmem [shape: bf16[64,32], index: 8, kind: input, shape index: {}]
  %s9 = inlined_call_operand.vmem [shape: bf16[32,48], index: 9, kind: input, shape index: {}]
  %s10 = inlined_call_operand.hbm [shape: f32[1,48], index: 10, kind: input, shape index: {}]
  %s11 = inlined_call_operand.hbm [shape: f32[16,36], index: 11, kind: input, shape index: {}]
  %s12 = inlined_call_operand.vmem [shape: f32[2,36], index: 12, kind: input, shape index: {}]
  %s13 = inlined_call_operand.hbm [shape: f32[16,48], index: 13, kind: output, shape index: {0}]
  %s14 = inlined_call_operand.hbm [shape: f32[2,32], index: 14, kind: output, shape index: {1}]
  %15 = xla_tuple %s13, %s14
  %s16 = sld [smem:[#allocation0]]
  $region90: #{tpu_custom_call.1} parent=0
    _
  %s18 = ssub.s32 1, %s16
  %s19 = scalar_select 0, %s18, %s16
  $region1: #{tpu_custom_call.1} parent=0
    #allocation2 [shape = 'u8[512]{0}', space=vmem, size = 0x400, scoped, tag = 'input window, operand 3, single buffered']
    #allocation3 [shape = 's32[1]{0}', space=sflag, size = 0x4, scoped, tag = 'scoped memory for tpu_custom_call.1']
    #allocation4 [shape = 's32[1]{0}', space=sflag, size = 0x4, scoped, tag = 'scoped memory for tpu_custom_call.1']
    #allocation5 [shape = 'u8[4096]{0}', space=vmem, size = 0x1000, scoped, tag = 'input window, operand 5, single buffered']
    #allocation6 [shape = 's32[1]{0}', space=sflag, size = 0x4, scoped, tag = 'scoped memory for tpu_custom_call.1']
    #allocation7 [shape = 'u8[512]{0}', space=vmem, size = 0x400, scoped, tag = 'input window, operand 7, single buffered']
    #allocation8 [shape = 'u8[512]{0}', space=vmem, size = 0x400, scoped, tag = 'input window, operand 10, single buffered']
    #allocation9 [shape = 's32[1]{0}', space=sflag, size = 0x4, scoped, tag = 'scoped memory for tpu_custom_call.1']
    #allocation10 [shape = 'u8[8192]{0}', space=vmem, size = 0x2000, scoped, tag = 'input window, operand 11, single buffered']
    #allocation11 [shape = 'u8[8192]{0}', space=vmem, size = 0x2000, scoped, tag = 'output window, operand 0, single buffered']
    #allocation12 [shape = 'u8[1024]{0}', space=vmem, size = 0x400, scoped, tag = 'output window, operand 1, single buffered']
    #allocation13 [shape = 's32[1]{0}', space=sflag, size = 0x4, scoped, tag = 'scoped memory for tpu_custom_call.1']
    %20 = vsyncpa [#allocation3], 0
    %21 = vsyncpa [#allocation6], 0
    %22 = vsyncpa [#allocation9], 0
    %23 = vsyncpa [#allocation4], 0
    %24 = vsyncpa [#allocation13], 0
    // Predicated region
    $region2: #{tpu_custom_call.1} parent=1 // pred_check
      _
    $region3: #{tpu_custom_call.1} parent=1 // pred_check_branch
      %26 = sbr.rel (0) target = $region5
    $region4: #{tpu_custom_call.1} parent=1 // pred_region
      _
    $region5: #{tpu_custom_call.1} parent=1 // pred_fallthru
      _
    // Predicated region
    $region6: #{tpu_custom_call.1} parent=1 // pred_check
      _
    $region7: #{tpu_custom_call.1} parent=1 // pred_check_branch
      %28 = sbr.rel (0) target = $region9
    $region8: #{tpu_custom_call.1} parent=1 // pred_region
      _
    $region9: #{tpu_custom_call.1} parent=1 // pred_fallthru
      _
    // Predicated region
    $region10: #{tpu_custom_call.1} parent=1 // pred_check
      _
    $region11: #{tpu_custom_call.1} parent=1 // pred_check_branch
      %30 = sbr.rel (0) target = $region13
    $region12: #{tpu_custom_call.1} parent=1 // pred_region
      _
    $region13: #{tpu_custom_call.1} parent=1 // pred_fallthru
      _
    // Predicated region
    $region14: #{tpu_custom_call.1} parent=1 // pred_check
      _
    $region15: #{tpu_custom_call.1} parent=1 // pred_check_branch
      %32 = sbr.rel (0) target = $region17
    $region16: #{tpu_custom_call.1} parent=1 // pred_region
      %s34 = ssub.s32 16, 16
      %35 = vsyncadd [#allocation3], %s34
      %s37 = sshll.u32 [#allocation2], 4
      %s38 = int_to_ptr.vmem [resolvable:$true] %s37
      %40 = dma.hbm_to_vmem [thread:$0]  %s3, 16, %s38, [#allocation3]
    $region17: #{tpu_custom_call.1} parent=1 // pred_fallthru
      _
    // Predicated region
    $region18: #{tpu_custom_call.1} parent=1 // pred_check
      _
    $region19: #{tpu_custom_call.1} parent=1 // pred_check_branch
      %42 = sbr.rel (0) target = $region21
    $region20: #{tpu_custom_call.1} parent=1 // pred_region
      _
    $region21: #{tpu_custom_call.1} parent=1 // pred_fallthru
      _
    // Predicated region
    $region22: #{tpu_custom_call.1} parent=1 // pred_check
      _
    $region23: #{tpu_custom_call.1} parent=1 // pred_check_branch
      %44 = sbr.rel (0) target = $region25
    $region24: #{tpu_custom_call.1} parent=1 // pred_region
      %s46 = ssub.s32 128, 128
      %47 = vsyncadd [#allocation6], %s46
      %s49 = sshll.u32 [#allocation5], 4
      %s50 = int_to_ptr.vmem [resolvable:$true] %s49
      %52 = dma.hbm_to_vmem [thread:$0]  %s5, 128, %s50, [#allocation6]
    $region25: #{tpu_custom_call.1} parent=1 // pred_fallthru
      _
    // Predicated region
    $region26: #{tpu_custom_call.1} parent=1 // pred_check
      _
    $region27: #{tpu_custom_call.1} parent=1 // pred_check_branch
      %54 = sbr.rel (0) target = $region29
    $region28: #{tpu_custom_call.1} parent=1 // pred_region
      _
    $region29: #{tpu_custom_call.1} parent=1 // pred_fallthru
      _
    // Predicated region
    $region30: #{tpu_custom_call.1} parent=1 // pred_check
      _
    $region31: #{tpu_custom_call.1} parent=1 // pred_check_branch
      %56 = sbr.rel (0) target = $region33
    $region32: #{tpu_custom_call.1} parent=1 // pred_region
      %s58 = ssub.s32 16, 16
      %59 = vsyncadd [#allocation6], %s58
      %s61 = sshll.u32 [#allocation7], 4
      %s62 = int_to_ptr.vmem [resolvable:$true] %s61
      %64 = dma.hbm_to_vmem [thread:$0]  %s7, 16, %s62, [#allocation6]
    $region33: #{tpu_custom_call.1} parent=1 // pred_fallthru
      _
    // Predicated region
    $region34: #{tpu_custom_call.1} parent=1 // pred_check
      _
    $region35: #{tpu_custom_call.1} parent=1 // pred_check_branch
      %66 = sbr.rel (0) target = $region37
    $region36: #{tpu_custom_call.1} parent=1 // pred_region
      _
    $region37: #{tpu_custom_call.1} parent=1 // pred_fallthru
      _
    // Predicated region
    $region38: #{tpu_custom_call.1} parent=1 // pred_check
      _
    $region39: #{tpu_custom_call.1} parent=1 // pred_check_branch
      %68 = sbr.rel (0) target = $region41
    $region40: #{tpu_custom_call.1} parent=1 // pred_region
      _
    $region41: #{tpu_custom_call.1} parent=1 // pred_fallthru
      _
    // Predicated region
    $region42: #{tpu_custom_call.1} parent=1 // pred_check
      _
    $region43: #{tpu_custom_call.1} parent=1 // pred_check_branch
      %70 = sbr.rel (0) target = $region45
    $region44: #{tpu_custom_call.1} parent=1 // pred_region
      %s72 = ssub.s32 16, 16
      %73 = vsyncadd [#allocation9], %s72
      %s75 = sshll.u32 [#allocation8], 4
      %s76 = int_to_ptr.vmem [resolvable:$true] %s75
      %78 = dma.hbm_to_vmem [thread:$0]  %s10, 16, %s76, [#allocation9]
    $region45: #{tpu_custom_call.1} parent=1 // pred_fallthru
      _
    // Predicated region
    $region46: #{tpu_custom_call.1} parent=1 // pred_check
      _
    $region47: #{tpu_custom_call.1} parent=1 // pred_check_branch
      %80 = sbr.rel (0) target = $region49
    $region48: #{tpu_custom_call.1} parent=1 // pred_region
      %s82 = ssub.s32 256, 256
      %83 = vsyncadd [#allocation9], %s82
      %s84 = sshll.u32 [#allocation10], 4
      %s85 = int_to_ptr.vmem [resolvable:$true] %s84
      %90 = dma.hbm_to_vmem [thread:$0]  %s11, 256, %s85, [#allocation9], 128, 128, 8
    $region49: #{tpu_custom_call.1} parent=1 // pred_fallthru
      _
    // Predicated region
    $region50: #{tpu_custom_call.1} parent=1 // pred_check
      _
    $region51: #{tpu_custom_call.1} parent=1 // pred_check_branch
      %92 = sbr.rel (0) target = $region53
    $region52: #{tpu_custom_call.1} parent=1 // pred_region
      _
    $region53: #{tpu_custom_call.1} parent=1 // pred_fallthru
      _
    // Predicated region
    $region54: #{tpu_custom_call.1} parent=1 // pred_check
      _
    $region55: #{tpu_custom_call.1} parent=1 // pred_check_branch
      %94 = sbr.rel (0) target = $region57
    $region56: #{tpu_custom_call.1} parent=1 // pred_region
      %95 = dma.done [#allocation3], 16
    $region57: #{tpu_custom_call.1} parent=1 // pred_fallthru
      _
    // Predicated region
    $region58: #{tpu_custom_call.1} parent=1 // pred_check
      _
    $region59: #{tpu_custom_call.1} parent=1 // pred_check_branch
      %97 = sbr.rel (0) target = $region61
    $region60: #{tpu_custom_call.1} parent=1 // pred_region
      %98 = dma.done [#allocation6], 128
    $region61: #{tpu_custom_call.1} parent=1 // pred_fallthru
      _
    // Predicated region
    $region62: #{tpu_custom_call.1} parent=1 // pred_check
      _
    $region63: #{tpu_custom_call.1} parent=1 // pred_check_branch
      %100 = sbr.rel (0) target = $region65
    $region64: #{tpu_custom_call.1} parent=1 // pred_region
      %101 = dma.done [#allocation6], 16
    $region65: #{tpu_custom_call.1} parent=1 // pred_fallthru
      _
    // Predicated region
    $region66: #{tpu_custom_call.1} parent=1 // pred_check
      _
    $region67: #{tpu_custom_call.1} parent=1 // pred_check_branch
      %103 = sbr.rel (0) target = $region69
    $region68: #{tpu_custom_call.1} parent=1 // pred_region
      %104 = dma.done [#allocation9], 16
    $region69: #{tpu_custom_call.1} parent=1 // pred_fallthru
      _
    // Predicated region
    $region70: #{tpu_custom_call.1} parent=1 // pred_check
      _
    $region71: #{tpu_custom_call.1} parent=1 // pred_check_branch
      %106 = sbr.rel (0) target = $region73
    $region72: #{tpu_custom_call.1} parent=1 // pred_region
      %107 = dma.done [#allocation9], 256
    $region73: #{tpu_custom_call.1} parent=1 // pred_fallthru
      _
    %v109 = vld [vmem:[%s0] sm:$0xff]
    %v110 = vld [vmem:[%s0 + $0x8] sm:$0xff]
    %v111 = vld [vmem:[%s0 + $0x10] sm:$0xff]
    %v112 = vld [vmem:[%s0 + $0x18] sm:$0xff]
    %v113 = vld [vmem:[%s0 + $0x20] sm:$0xf]
    %v114 = vld [vmem:[%s1] sm:$0xff]
    %v115 = vld [vmem:[%s1 + $0x8] sm:$0xff]
    %v116 = vld [vmem:[%s1 + $0x10] sm:$0xff]
    %v117 = vld [vmem:[%s1 + $0x18] sm:$0xff]
    %v118 = vld [vmem:[%s1 + $0x20] sm:$0xf]
    %v119 = vld [vmem:[#allocation5] sm:$0x3f]
    %v120 = vpack.c.bf16 %v110, %v109
    %v121 = vpack.c.bf16 %v112, %v111
    %v122 = vpack.c.bf16 %v113, %v113
    %v123 = vld [vmem:[%s2] sm:$0xf]
    %v124 = vld [vmem:[%s2 + $0x4] sm:$0xf]
    %v125 = vld [vmem:[%s2 + $0x8] sm:$0xf]
    %v126 = vld [vmem:[%s2 + $0xc] sm:$0xf]
    %v127 = vld [vmem:[#allocation2] sm:$0x1]
    %v129 = vlaneseq
    %v130 = vshrl.u32 %v129, 7
    %v131 = vsub.s32 0, %v130
    %v132 = vrot.slane %v127, %v131
    %v138 = vunpack.c.l.b16 %v123
    %v139 = vunpack.c.l.b16 %v124
    %v140 = vunpack.c.l.b16 %v125
    %v141 = vunpack.c.l.b16 %v126
    %v142 = vpack.c.b16 %v139, %v138
    %v143 = vpack.c.b16 %v141, %v140
    %vm146 = vcmask 261120
    %v148 = vsel %vm146, %v120, 0
    %v151 = vsel %vm146, %v121, 0
    %v154 = vsel %vm146, %v122, 0
    %156 = vmatprep.subr.bf16.mxu0 0
    %157 = vmatpush1.bf16.msra.mxu0 0
    %158 = vmatprep.subr.bf16.mxu0 0
    %159 = vmatpush1.bf16.msra.mxu0 0
    %160 = vmatprep.subr.bf16.mxu0 0
    %161 = vmatpush1.bf16.msra.mxu0 0
    %162 = vmatprep.subr.bf16.mxu0 0
    %163 = vmatpush1.bf16.msra.mxu0 0
    %164 = vmatprep.subr.bf16.mxu0 0
    %165 = vmatpush1.bf16.msra.mxu0 0
    %166 = vmatprep.subr.bf16.mxu0 0
    %167 = vmatpush1.bf16.msra.mxu0 0
    %168 = vmatprep.subr.bf16.mxu0 0
    %169 = vmatpush1.bf16.msra.mxu0 %v143
    %170 = vmatprep.subr.bf16.mxu0 0
    %171 = vmatpush1.bf16.msra.mxu0 %v142
    %172 = vmatprep.subr.bf16.mxu0 0
    %173 = vmatpush2.bf16.msra.mxu0 0
    %174 = vmatprep.subr.bf16.mxu0 0
    %175 = vmatpush2.bf16.msra.mxu0 0
    %176 = vmatprep.subr.bf16.mxu0 0
    %177 = vmatpush2.bf16.msra.mxu0 0
    %178 = vmatprep.subr.bf16.mxu0 0
    %179 = vmatpush2.bf16.msra.mxu0 0
    %180 = vmatprep.subr.bf16.mxu0 0
    %181 = vmatpush2.bf16.msra.mxu0 0
    %182 = vmatprep.subr.bf16.mxu0 0
    %183 = vmatpush2.bf16.msra.mxu0 0
    %184 = vmatprep.subr.bf16.mxu0 0
    %185 = vmatpush2.bf16.msra.mxu0 0
    %186 = vmatprep.subr.bf16.mxu0 0
    %187 = vmatpush2.bf16.msra.mxu0 0
    %188 = vmatprep.mubr.bf16.mxu0 0
    %189 = vmatmul.mubr.bf16.gmra.mxu0 %v148
    %v190 = vpop.f32.mrf.mxu0
    %v191 = vadd.f32 %v132, %v190
    %v192 = vpop.f32.mrf.mxu0
    %v193 = vpop.f32.mrf.mxu0
    %v194 = vadd.f32 %v132, %v193
    %v195 = vpop.f32.mrf.mxu0
    %196 = vmatprep.mubr.bf16.mxu0 0
    %197 = vmatmul.mubr.bf16.gmra.mxu0 %v151
    %v198 = vpop.f32.mrf.mxu0
    %v199 = vadd.f32 %v132, %v198
    %v200 = vpop.f32.mrf.mxu0
    %v201 = vpop.f32.mrf.mxu0
    %v202 = vadd.f32 %v132, %v201
    %v203 = vpop.f32.mrf.mxu0
    %204 = vmatprep.mubr.bf16.mxu0 0
    %205 = vmatmul.mubr.bf16.gmra.mxu0 %v154
    %v206 = vpop.f32.mrf.mxu0
    %v207 = vadd.f32 %v132, %v206
    %v208 = vpop.f32.mrf.mxu0
    %v209 = vpop.f32.mrf.mxu0
    %v210 = vpop.f32.mrf.mxu0
    %211 = vdwg.mxu0
    %v212 = vpack.c.bf16 %v194, %v191
    %v213 = vpack.c.bf16 %v202, %v199
    %v214 = vpack.c.bf16 %v207, %v207
    %218 = vrot.lane.b32.xlu0 %v212, 96
    %v219 = vpop.permute.xlu0 %218
    %220 = vrot.lane.b32.xlu0 %v213, 96
    %v221 = vpop.permute.xlu0 %220
    %222 = vrot.lane.b32.xlu0 %v214, 96
    %v223 = vpop.permute.xlu0 %222
    %vm224 = vcmask 130048
    %v226 = vsel %vm224, %v212, 0
    %v229 = vsel %vm224, %v213, 0
    %v232 = vsel %vm224, %v214, 0
    %v235 = vsel %vm224, %v219, 0
    %v238 = vsel %vm224, %v221, 0
    %v241 = vsel %vm224, %v223, 0
    %243 = vmatprep.subr.bf16.mxu0 0
    %244 = vmatpush1.bf16.xpose.msra.mxu0 0
    %245 = vmatprep.subr.bf16.mxu0 0
    %246 = vmatpush1.bf16.xpose.msra.mxu0 0
    %247 = vmatprep.subr.bf16.mxu0 0
    %248 = vmatpush1.bf16.xpose.msra.mxu0 0
    %249 = vmatprep.subr.bf16.mxu0 0
    %250 = vmatpush1.bf16.xpose.msra.mxu0 0
    %251 = vmatprep.subr.bf16.mxu0 0
    %252 = vmatpush1.bf16.xpose.msra.mxu0 0
    %253 = vmatprep.subr.bf16.mxu0 0
    %254 = vmatpush1.bf16.xpose.msra.mxu0 %v241
    %255 = vmatprep.subr.bf16.mxu0 0
    %256 = vmatpush1.bf16.xpose.msra.mxu0 %v238
    %257 = vmatprep.subr.bf16.mxu0 0
    %258 = vmatpush1.bf16.xpose.msra.mxu0 %v235
    %259 = vmatprep.subr.bf16.mxu0 0
    %260 = vmatpush2.bf16.xpose.msra.mxu0 0
    %261 = vmatprep.subr.bf16.mxu0 0
    %262 = vmatpush2.bf16.xpose.msra.mxu0 0
    %263 = vmatprep.subr.bf16.mxu0 0
    %264 = vmatpush2.bf16.xpose.msra.mxu0 0
    %265 = vmatprep.subr.bf16.mxu0 0
    %266 = vmatpush2.bf16.xpose.msra.mxu0 0
    %267 = vmatprep.subr.bf16.mxu0 0
    %268 = vmatpush2.bf16.xpose.msra.mxu0 0
    %269 = vmatprep.subr.bf16.mxu0 0
    %270 = vmatpush2.bf16.xpose.msra.mxu0 0
    %271 = vmatprep.subr.bf16.mxu0 0
    %272 = vmatpush2.bf16.xpose.msra.mxu0 0
    %273 = vmatprep.subr.bf16.mxu0 0
    %274 = vmatpush2.bf16.xpose.msra.mxu0 0
    %275 = vmatprep.mubr.bf16.mxu0 0
    %276 = vmatmul.mubr.bf16.gmra.mxu0 %v226
    %v277 = vpop.f32.mrf.mxu0
    %v278 = vadd.f32 %v114, %v277
    %v279 = vpop.f32.mrf.mxu0
    %v280 = vpop.f32.mrf.mxu0
    %v281 = vadd.f32 %v115, %v280
    %v282 = vpop.f32.mrf.mxu0
    %283 = vmatprep.mubr.bf16.mxu0 0
    %284 = vmatmul.mubr.bf16.gmra.mxu0 %v229
    %v285 = vpop.f32.mrf.mxu0
    %v286 = vadd.f32 %v116, %v285
    %v287 = vpop.f32.mrf.mxu0
    %v288 = vpop.f32.mrf.mxu0
    %v289 = vadd.f32 %v117, %v288
    %v290 = vpop.f32.mrf.mxu0
    %291 = vmatprep.mubr.bf16.mxu0 0
    %292 = vmatmul.mubr.bf16.gmra.mxu0 %v232
    %v293 = vpop.f32.mrf.mxu0
    %v294 = vadd.f32 %v118, %v293
    %v295 = vpop.f32.mrf.mxu0
    %v296 = vpop.f32.mrf.mxu0
    %v297 = vpop.f32.mrf.mxu0
    %298 = vdwg.mxu0
    %vm299 = vcmask 293888
    %v300 = vsel %vm299, %v278, -inf
    %301 = vmax.xlane.f32.xlu0 %v300
    %v302 = vpop.xlane.xlu0 %301
    %v303 = vsel %vm299, %v281, -inf
    %304 = vmax.xlane.f32.xlu0 %v303
    %v305 = vpop.xlane.xlu0 %304
    %v306 = vsel %vm299, %v286, -inf
    %307 = vmax.xlane.f32.xlu0 %v306
    %v308 = vpop.xlane.xlu0 %307
    %v309 = vsel %vm299, %v289, -inf
    %310 = vmax.xlane.f32.xlu0 %v309
    %v311 = vpop.xlane.xlu0 %310
    %vm312 = vcmask 289792
    %v313 = vsel %vm312, %v294, -inf
    %314 = vmax.xlane.f32.xlu0 %v313
    %v315 = vpop.xlane.xlu0 %314
    %v316 = vsub.f32 %v278, %v302
    %v317 = vsub.f32 %v281, %v305
    %v318 = vsub.f32 %v286, %v308
    %v319 = vsub.f32 %v289, %v311
    %v320 = vsub.f32 %v294, %v315
    %v321 = vmul.f32 %v316, 1.442695
    %v322 = vpow.pop %v321
    %v323 = vmul.f32 %v317, 1.442695
    %v324 = vpow.pop %v323
    %v325 = vmul.f32 %v318, 1.442695
    %v326 = vpow.pop %v325
    %v327 = vmul.f32 %v319, 1.442695
    %v328 = vpow.pop %v327
    %v329 = vmul.f32 %v320, 1.442695
    %v330 = vpow.pop %v329
    %v331 = vsel %vm299, %v322, 0.0
    %332 = vadd.xlane.f32.xlu0 %v331
    %v333 = vpop.xlane.xlu0 %332
    %v334 = vsel %vm299, %v324, 0.0
    %335 = vadd.xlane.f32.xlu0 %v334
    %v336 = vpop.xlane.xlu0 %335
    %v337 = vsel %vm299, %v326, 0.0
    %338 = vadd.xlane.f32.xlu0 %v337
    %v339 = vpop.xlane.xlu0 %338
    %v340 = vsel %vm299, %v328, 0.0
    %341 = vadd.xlane.f32.xlu0 %v340
    %v342 = vpop.xlane.xlu0 %341
    %v343 = vsel %vm312, %v330, 0.0
    %344 = vadd.xlane.f32.xlu0 %v343
    %v345 = vpop.xlane.xlu0 %344
    %v346 = vrcp.pop %v333
    %v347 = vrcp.pop %v336
    %v348 = vrcp.pop %v339
    %v349 = vrcp.pop %v342
    %v350 = vrcp.pop %v345
    %v351 = vmul.f32 %v322, %v346
    %v352 = vmul.f32 %v324, %v347
    %v353 = vmul.f32 %v326, %v348
    %v354 = vmul.f32 %v328, %v349
    %v355 = vmul.f32 %v330, %v350
    %v356 = vpack.c.bf16 %v352, %v351
    %v357 = vpack.c.bf16 %v354, %v353
    %v358 = vpack.c.bf16 %v355, %v355
    %359 = vrot.lane.b32.xlu0 %v212, 64
    %v360 = vpop.permute.xlu0 %359
    %361 = vrot.lane.b32.xlu0 %v213, 64
    %v362 = vpop.permute.xlu0 %361
    %363 = vrot.lane.b32.xlu0 %v214, 64
    %v364 = vpop.permute.xlu0 %363
    %v368 = vsel %vm299, %v356, 0
    %v371 = vsel %vm299, %v357, 0
    %v374 = vsel %vm299, %v358, 0
    %vm376 = vcmask 1041408
    %v378 = vsel %vm376, %v364, 0
    %380 = vmatprep.subr.bf16.mxu0 0
    %381 = vmatpush1.bf16.msra.mxu0 0
    %382 = vmatprep.subr.bf16.mxu0 0
    %383 = vmatpush1.bf16.msra.mxu0 0
    %384 = vmatprep.subr.bf16.mxu0 0
    %385 = vmatpush1.bf16.msra.mxu0 0
    %386 = vmatprep.subr.bf16.mxu0 0
    %387 = vmatpush1.bf16.msra.mxu0 0
    %388 = vmatprep.subr.bf16.mxu0 0
    %389 = vmatpush1.bf16.msra.mxu0 0
    %390 = vmatprep.subr.bf16.mxu0 0
    %391 = vmatpush1.bf16.msra.mxu0 %v378
    %392 = vmatprep.subr.bf16.mxu0 0
    %393 = vmatpush1.bf16.msra.mxu0 %v362
    %394 = vmatprep.subr.bf16.mxu0 0
    %395 = vmatpush1.bf16.msra.mxu0 %v360
    %396 = vmatprep.subr.bf16.mxu0 0
    %397 = vmatpush2.bf16.msra.mxu0 0
    %398 = vmatprep.subr.bf16.mxu0 0
    %399 = vmatpush2.bf16.msra.mxu0 0
    %400 = vmatprep.subr.bf16.mxu0 0
    %401 = vmatpush2.bf16.msra.mxu0 0
    %402 = vmatprep.subr.bf16.mxu0 0
    %403 = vmatpush2.bf16.msra.mxu0 0
    %404 = vmatprep.subr.bf16.mxu0 0
    %405 = vmatpush2.bf16.msra.mxu0 0
    %406 = vmatprep.subr.bf16.mxu0 0
    %407 = vmatpush2.bf16.msra.mxu0 0
    %408 = vmatprep.subr.bf16.mxu0 0
    %409 = vmatpush2.bf16.msra.mxu0 0
    %410 = vmatprep.subr.bf16.mxu0 0
    %411 = vmatpush2.bf16.msra.mxu0 0
    %412 = vmatprep.mubr.bf16.mxu0 0
    %413 = vmatmul.mubr.bf16.gmra.mxu0 %v368
    %v414 = vpop.f32.mrf.mxu0
    %v415 = vadd.f32 0.0, %v414
    %v416 = vpop.f32.mrf.mxu0
    %v417 = vpop.f32.mrf.mxu0
    %v418 = vadd.f32 0.0, %v417
    %v419 = vpop.f32.mrf.mxu0
    %420 = vmatprep.mubr.bf16.mxu0 0
    %421 = vmatmul.mubr.bf16.gmra.mxu0 %v371
    %v422 = vpop.f32.mrf.mxu0
    %v423 = vadd.f32 0.0, %v422
    %v424 = vpop.f32.mrf.mxu0
    %v425 = vpop.f32.mrf.mxu0
    %v426 = vadd.f32 0.0, %v425
    %v427 = vpop.f32.mrf.mxu0
    %428 = vmatprep.mubr.bf16.mxu0 0
    %429 = vmatmul.mubr.bf16.gmra.mxu0 %v374
    %v430 = vpop.f32.mrf.mxu0
    %v431 = vadd.f32 0.0, %v430
    %v432 = vpop.f32.mrf.mxu0
    %v433 = vpop.f32.mrf.mxu0
    %v434 = vpop.f32.mrf.mxu0
    %435 = vdwg.mxu0
    %436 = vrot.lane.b32.xlu0 %v212, 112
    %v437 = vpop.permute.xlu0 %436
    %438 = vrot.lane.b32.xlu0 %v213, 112
    %v439 = vpop.permute.xlu0 %438
    %440 = vrot.lane.b32.xlu0 %v214, 112
    %v441 = vpop.permute.xlu0 %440
    %442 = vrot.lane.b32.xlu0 %v212, 80
    %v443 = vpop.permute.xlu0 %442
    %444 = vrot.lane.b32.xlu0 %v213, 80
    %v445 = vpop.permute.xlu0 %444
    %446 = vrot.lane.b32.xlu0 %v214, 80
    %v447 = vpop.permute.xlu0 %446
    %v449 = vsel %vm224, %v437, 0
    %v452 = vsel %vm224, %v439, 0
    %v455 = vsel %vm224, %v441, 0
    %v458 = vsel %vm224, %v443, 0
    %v461 = vsel %vm224, %v445, 0
    %v464 = vsel %vm224, %v447, 0
    %466 = vmatprep.subr.bf16.mxu0 0
    %467 = vmatpush1.bf16.xpose.msra.mxu0 0
    %468 = vmatprep.subr.bf16.mxu0 0
    %469 = vmatpush1.bf16.xpose.msra.mxu0 0
    %470 = vmatprep.subr.bf16.mxu0 0
    %471 = vmatpush1.bf16.xpose.msra.mxu0 0
    %472 = vmatprep.subr.bf16.mxu0 0
    %473 = vmatpush1.bf16.xpose.msra.mxu0 0
    %474 = vmatprep.subr.bf16.mxu0 0
    %475 = vmatpush1.bf16.xpose.msra.mxu0 0
    %476 = vmatprep.subr.bf16.mxu0 0
    %477 = vmatpush1.bf16.xpose.msra.mxu0 %v464
    %478 = vmatprep.subr.bf16.mxu0 0
    %479 = vmatpush1.bf16.xpose.msra.mxu0 %v461
    %480 = vmatprep.subr.bf16.mxu0 0
    %481 = vmatpush1.bf16.xpose.msra.mxu0 %v458
    %482 = vmatprep.subr.bf16.mxu0 0
    %483 = vmatpush2.bf16.xpose.msra.mxu0 0
    %484 = vmatprep.subr.bf16.mxu0 0
    %485 = vmatpush2.bf16.xpose.msra.mxu0 0
    %486 = vmatprep.subr.bf16.mxu0 0
    %487 = vmatpush2.bf16.xpose.msra.mxu0 0
    %488 = vmatprep.subr.bf16.mxu0 0
    %489 = vmatpush2.bf16.xpose.msra.mxu0 0
    %490 = vmatprep.subr.bf16.mxu0 0
    %491 = vmatpush2.bf16.xpose.msra.mxu0 0
    %492 = vmatprep.subr.bf16.mxu0 0
    %493 = vmatpush2.bf16.xpose.msra.mxu0 0
    %494 = vmatprep.subr.bf16.mxu0 0
    %495 = vmatpush2.bf16.xpose.msra.mxu0 0
    %496 = vmatprep.subr.bf16.mxu0 0
    %497 = vmatpush2.bf16.xpose.msra.mxu0 0
    %498 = vmatprep.mubr.bf16.mxu0 0
    %499 = vmatmul.mubr.bf16.gmra.mxu0 %v449
    %v500 = vpop.f32.mrf.mxu0
    %v501 = vadd.f32 %v114, %v500
    %v502 = vpop.f32.mrf.mxu0
    %v503 = vpop.f32.mrf.mxu0
    %v504 = vadd.f32 %v115, %v503
    %v505 = vpop.f32.mrf.mxu0
    %506 = vmatprep.mubr.bf16.mxu0 0
    %507 = vmatmul.mubr.bf16.gmra.mxu0 %v452
    %v508 = vpop.f32.mrf.mxu0
    %v509 = vadd.f32 %v116, %v508
    %v510 = vpop.f32.mrf.mxu0
    %v511 = vpop.f32.mrf.mxu0
    %v512 = vadd.f32 %v117, %v511
    %v513 = vpop.f32.mrf.mxu0
    %514 = vmatprep.mubr.bf16.mxu0 0
    %515 = vmatmul.mubr.bf16.gmra.mxu0 %v455
    %v516 = vpop.f32.mrf.mxu0
    %v517 = vadd.f32 %v118, %v516
    %v518 = vpop.f32.mrf.mxu0
    %v519 = vpop.f32.mrf.mxu0
    %v520 = vpop.f32.mrf.mxu0
    %521 = vdwg.mxu0
    %v522 = vsel %vm299, %v501, -inf
    %523 = vmax.xlane.f32.xlu0 %v522
    %v524 = vpop.xlane.xlu0 %523
    %v525 = vsel %vm299, %v504, -inf
    %526 = vmax.xlane.f32.xlu0 %v525
    %v527 = vpop.xlane.xlu0 %526
    %v528 = vsel %vm299, %v509, -inf
    %529 = vmax.xlane.f32.xlu0 %v528
    %v530 = vpop.xlane.xlu0 %529
    %v531 = vsel %vm299, %v512, -inf
    %532 = vmax.xlane.f32.xlu0 %v531
    %v533 = vpop.xlane.xlu0 %532
    %v534 = vsel %vm312, %v517, -inf
    %535 = vmax.xlane.f32.xlu0 %v534
    %v536 = vpop.xlane.xlu0 %535
    %v537 = vsub.f32 %v501, %v524
    %v538 = vsub.f32 %v504, %v527
    %v539 = vsub.f32 %v509, %v530
    %v540 = vsub.f32 %v512, %v533
    %v541 = vsub.f32 %v517, %v536
    %v542 = vmul.f32 %v537, 1.442695
    %v543 = vpow.pop %v542
    %v544 = vmul.f32 %v538, 1.442695
    %v545 = vpow.pop %v544
    %v546 = vmul.f32 %v539, 1.442695
    %v547 = vpow.pop %v546
    %v548 = vmul.f32 %v540, 1.442695
    %v549 = vpow.pop %v548
    %v550 = vmul.f32 %v541, 1.442695
    %v551 = vpow.pop %v550
    %v552 = vsel %vm299, %v543, 0.0
    %553 = vadd.xlane.f32.xlu0 %v552
    %v554 = vpop.xlane.xlu0 %553
    %v555 = vsel %vm299, %v545, 0.0
    %556 = vadd.xlane.f32.xlu0 %v555
    %v557 = vpop.xlane.xlu0 %556
    %v558 = vsel %vm299, %v547, 0.0
    %559 = vadd.xlane.f32.xlu0 %v558
    %v560 = vpop.xlane.xlu0 %559
    %v561 = vsel %vm299, %v549, 0.0
    %562 = vadd.xlane.f32.xlu0 %v561
    %v563 = vpop.xlane.xlu0 %562
    %v564 = vsel %vm312, %v551, 0.0
    %565 = vadd.xlane.f32.xlu0 %v564
    %v566 = vpop.xlane.xlu0 %565
    %v567 = vrcp.pop %v554
    %v568 = vrcp.pop %v557
    %v569 = vrcp.pop %v560
    %v570 = vrcp.pop %v563
    %v571 = vrcp.pop %v566
    %v572 = vmul.f32 %v543, %v567
    %v573 = vmul.f32 %v545, %v568
    %v574 = vmul.f32 %v547, %v569
    %v575 = vmul.f32 %v549, %v570
    %v576 = vmul.f32 %v551, %v571
    %v577 = vpack.c.bf16 %v573, %v572
    %v578 = vpack.c.bf16 %v575, %v574
    %v579 = vpack.c.bf16 %v576, %v576
    %580 = vrot.lane.b32.xlu0 %v212, 48
    %v581 = vpop.permute.xlu0 %580
    %582 = vrot.lane.b32.xlu0 %v213, 48
    %v583 = vpop.permute.xlu0 %582
    %584 = vrot.lane.b32.xlu0 %v214, 48
    %v585 = vpop.permute.xlu0 %584
    %v589 = vsel %vm299, %v577, 0
    %v592 = vsel %vm299, %v578, 0
    %v595 = vsel %vm299, %v579, 0
    %v598 = vsel %vm376, %v585, 0
    %600 = vmatprep.subr.bf16.mxu0 0
    %601 = vmatpush1.bf16.msra.mxu0 0
    %602 = vmatprep.subr.bf16.mxu0 0
    %603 = vmatpush1.bf16.msra.mxu0 0
    %604 = vmatprep.subr.bf16.mxu0 0
    %605 = vmatpush1.bf16.msra.mxu0 0
    %606 = vmatprep.subr.bf16.mxu0 0
    %607 = vmatpush1.bf16.msra.mxu0 0
    %608 = vmatprep.subr.bf16.mxu0 0
    %609 = vmatpush1.bf16.msra.mxu0 0
    %610 = vmatprep.subr.bf16.mxu0 0
    %611 = vmatpush1.bf16.msra.mxu0 %v598
    %612 = vmatprep.subr.bf16.mxu0 0
    %613 = vmatpush1.bf16.msra.mxu0 %v583
    %614 = vmatprep.subr.bf16.mxu0 0
    %615 = vmatpush1.bf16.msra.mxu0 %v581
    %616 = vmatprep.subr.bf16.mxu0 0
    %617 = vmatpush2.bf16.msra.mxu0 0
    %618 = vmatprep.subr.bf16.mxu0 0
    %619 = vmatpush2.bf16.msra.mxu0 0
    %620 = vmatprep.subr.bf16.mxu0 0
    %621 = vmatpush2.bf16.msra.mxu0 0
    %622 = vmatprep.subr.bf16.mxu0 0
    %623 = vmatpush2.bf16.msra.mxu0 0
    %624 = vmatprep.subr.bf16.mxu0 0
    %625 = vmatpush2.bf16.msra.mxu0 0
    %626 = vmatprep.subr.bf16.mxu0 0
    %627 = vmatpush2.bf16.msra.mxu0 0
    %628 = vmatprep.subr.bf16.mxu0 0
    %629 = vmatpush2.bf16.msra.mxu0 0
    %630 = vmatprep.subr.bf16.mxu0 0
    %631 = vmatpush2.bf16.msra.mxu0 0
    %632 = vmatprep.mubr.bf16.mxu0 0
    %633 = vmatmul.mubr.bf16.gmra.mxu0 %v589
    %v634 = vpop.f32.mrf.mxu0
    %v635 = vadd.f32 0.0, %v634
    %v636 = vpop.f32.mrf.mxu0
    %v637 = vpop.f32.mrf.mxu0
    %v638 = vadd.f32 0.0, %v637
    %v639 = vpop.f32.mrf.mxu0
    %640 = vmatprep.mubr.bf16.mxu0 0
    %641 = vmatmul.mubr.bf16.gmra.mxu0 %v592
    %v642 = vpop.f32.mrf.mxu0
    %v643 = vadd.f32 0.0, %v642
    %v644 = vpop.f32.mrf.mxu0
    %v645 = vpop.f32.mrf.mxu0
    %v646 = vadd.f32 0.0, %v645
    %v647 = vpop.f32.mrf.mxu0
    %648 = vmatprep.mubr.bf16.mxu0 0
    %649 = vmatmul.mubr.bf16.gmra.mxu0 %v595
    %v650 = vpop.f32.mrf.mxu0
    %v651 = vadd.f32 0.0, %v650
    %v652 = vpop.f32.mrf.mxu0
    %v653 = vpop.f32.mrf.mxu0
    %v654 = vpop.f32.mrf.mxu0
    %655 = vdwg.mxu0
    %661 = vrot.lane.b32.xlu0 %v635, 16
    %v662 = vpop.permute.xlu0 %661
    %663 = vrot.lane.b32.xlu0 %v638, 16
    %v664 = vpop.permute.xlu0 %663
    %665 = vrot.lane.b32.xlu0 %v643, 16
    %v666 = vpop.permute.xlu0 %665
    %667 = vrot.lane.b32.xlu0 %v646, 16
    %v668 = vpop.permute.xlu0 %667
    %669 = vrot.lane.b32.xlu0 %v651, 16
    %v670 = vpop.permute.xlu0 %669
    %v676 = vsel %vm224, %v415, %v662
    %v677 = vsel %vm224, %v418, %v664
    %v678 = vsel %vm224, %v423, %v666
    %v679 = vsel %vm224, %v426, %v668
    %v680 = vsel %vm224, %v431, %v670
    %v681 = vpack.c.bf16 %v677, %v676
    %v682 = vpack.c.bf16 %v679, %v678
    %v683 = vpack.c.bf16 %v680, %v680
    %v684 = vld [vmem:[%s4] sm:$0xf]
    %v685 = vld [vmem:[%s4 + $0x4] sm:$0xf]
    %v686 = vld [vmem:[%s4 + $0x8] sm:$0xf]
    %v687 = vld [vmem:[%s4 + $0xc] sm:$0xf]
    %v688 = vlaneseq
    %v689 = vshrl.u32 %v688, 7
    %v690 = vsub.s32 0, %v689
    %v691 = vrot.slane %v119, %v690
    %v696 = vunpack.c.l.b16 %v684
    %v697 = vunpack.c.l.b16 %v685
    %v698 = vunpack.c.l.b16 %v686
    %v699 = vunpack.c.l.b16 %v687
    %v700 = vpack.c.b16 %v697, %v696
    %v701 = vpack.c.b16 %v699, %v698
    %v705 = vsel %vm146, %v681, 0
    %v708 = vsel %vm146, %v682, 0
    %v711 = vsel %vm146, %v683, 0
    %713 = vmatprep.subr.bf16.mxu0 0
    %714 = vmatpush1.bf16.msra.mxu0 0
    %715 = vmatprep.subr.bf16.mxu0 0
    %716 = vmatpush1.bf16.msra.mxu0 0
    %717 = vmatprep.subr.bf16.mxu0 0
    %718 = vmatpush1.bf16.msra.mxu0 0
    %719 = vmatprep.subr.bf16.mxu0 0
    %720 = vmatpush1.bf16.msra.mxu0 0
    %721 = vmatprep.subr.bf16.mxu0 0
    %722 = vmatpush1.bf16.msra.mxu0 0
    %723 = vmatprep.subr.bf16.mxu0 0
    %724 = vmatpush1.bf16.msra.mxu0 0
    %725 = vmatprep.subr.bf16.mxu0 0
    %726 = vmatpush1.bf16.msra.mxu0 %v701
    %727 = vmatprep.subr.bf16.mxu0 0
    %728 = vmatpush1.bf16.msra.mxu0 %v700
    %729 = vmatprep.subr.bf16.mxu0 0
    %730 = vmatpush2.bf16.msra.mxu0 0
    %731 = vmatprep.subr.bf16.mxu0 0
    %732 = vmatpush2.bf16.msra.mxu0 0
    %733 = vmatprep.subr.bf16.mxu0 0
    %734 = vmatpush2.bf16.msra.mxu0 0
    %735 = vmatprep.subr.bf16.mxu0 0
    %736 = vmatpush2.bf16.msra.mxu0 0
    %737 = vmatprep.subr.bf16.mxu0 0
    %738 = vmatpush2.bf16.msra.mxu0 0
    %739 = vmatprep.subr.bf16.mxu0 0
    %740 = vmatpush2.bf16.msra.mxu0 0
    %741 = vmatprep.subr.bf16.mxu0 0
    %742 = vmatpush2.bf16.msra.mxu0 0
    %743 = vmatprep.subr.bf16.mxu0 0
    %744 = vmatpush2.bf16.msra.mxu0 0
    %745 = vmatprep.mubr.bf16.mxu0 0
    %746 = vmatmul.mubr.bf16.gmra.mxu0 %v705
    %v747 = vpop.f32.mrf.mxu0
    %v748 = vadd.f32 %v691, %v747
    %v749 = vpop.f32.mrf.mxu0
    %v750 = vpop.f32.mrf.mxu0
    %v751 = vadd.f32 %v691, %v750
    %v752 = vpop.f32.mrf.mxu0
    %753 = vmatprep.mubr.bf16.mxu0 0
    %754 = vmatmul.mubr.bf16.gmra.mxu0 %v708
    %v755 = vpop.f32.mrf.mxu0
    %v756 = vadd.f32 %v691, %v755
    %v757 = vpop.f32.mrf.mxu0
    %v758 = vpop.f32.mrf.mxu0
    %v759 = vadd.f32 %v691, %v758
    %v760 = vpop.f32.mrf.mxu0
    %761 = vmatprep.mubr.bf16.mxu0 0
    %762 = vmatmul.mubr.bf16.gmra.mxu0 %v711
    %v763 = vpop.f32.mrf.mxu0
    %v764 = vadd.f32 %v691, %v763
    %v765 = vpop.f32.mrf.mxu0
    %v766 = vpop.f32.mrf.mxu0
    %v767 = vpop.f32.mrf.mxu0
    %768 = vdwg.mxu0
    %v769 = vadd.f32 %v109, %v748
    %v770 = vadd.f32 %v110, %v751
    %v771 = vadd.f32 %v111, %v756
    %v772 = vadd.f32 %v112, %v759
    %v773 = vadd.f32 %v113, %v764
    %v774 = vsel %vm146, %v769, 0.0
    %775 = vadd.xlane.f32.xlu0 %v774
    %v776 = vpop.xlane.xlu0 %775
    %v777 = vsel %vm146, %v770, 0.0
    %778 = vadd.xlane.f32.xlu0 %v777
    %v779 = vpop.xlane.xlu0 %778
    %v780 = vsel %vm146, %v771, 0.0
    %781 = vadd.xlane.f32.xlu0 %v780
    %v782 = vpop.xlane.xlu0 %781
    %v783 = vsel %vm146, %v772, 0.0
    %784 = vadd.xlane.f32.xlu0 %v783
    %v785 = vpop.xlane.xlu0 %784
    %vm786 = vcmask 257024
    %v787 = vsel %vm786, %v773, 0.0
    %788 = vadd.xlane.f32.xlu0 %v787
    %v789 = vpop.xlane.xlu0 %788
    %v790 = vrcp.pop 32.0
    %v791 = vmul.f32 %v776, %v790
    %v792 = vmul.f32 %v779, %v790
    %v793 = vmul.f32 %v782, %v790
    %v794 = vmul.f32 %v785, %v790
    %v795 = vmul.f32 %v789, %v790
    %v796 = vsub.f32 %v769, %v791
    %v797 = vsub.f32 %v770, %v792
    %v798 = vsub.f32 %v771, %v793
    %v799 = vsub.f32 %v772, %v794
    %v800 = vsub.f32 %v773, %v795
    %v801 = vmul.f32 %v796, %v796
    %v802 = vmul.f32 %v797, %v797
    %v803 = vmul.f32 %v798, %v798
    %v804 = vmul.f32 %v799, %v799
    %v805 = vmul.f32 %v800, %v800
    %v806 = vsel %vm146, %v801, 0.0
    %807 = vadd.xlane.f32.xlu0 %v806
    %v808 = vpop.xlane.xlu0 %807
    %v809 = vsel %vm146, %v802, 0.0
    %810 = vadd.xlane.f32.xlu0 %v809
    %v811 = vpop.xlane.xlu0 %810
    %v812 = vsel %vm146, %v803, 0.0
    %813 = vadd.xlane.f32.xlu0 %v812
    %v814 = vpop.xlane.xlu0 %813
    %v815 = vsel %vm146, %v804, 0.0
    %816 = vadd.xlane.f32.xlu0 %v815
    %v817 = vpop.xlane.xlu0 %816
    %v818 = vsel %vm786, %v805, 0.0
    %819 = vadd.xlane.f32.xlu0 %v818
    %v820 = vpop.xlane.xlu0 %819
    %v821 = vmul.f32 %v808, %v790
    %v822 = vmul.f32 %v811, %v790
    %v823 = vmul.f32 %v814, %v790
    %v824 = vmul.f32 %v817, %v790
    %v825 = vmul.f32 %v820, %v790
    %v826 = vadd.f32 %v821, 1e-12
    %v827 = vadd.f32 %v822, 1e-12
    %v828 = vadd.f32 %v823, 1e-12
    %v829 = vadd.f32 %v824, 1e-12
    %v830 = vadd.f32 %v825, 1e-12
    %v831 = vrsqrt.pop %v826
    %v832 = vrsqrt.pop %v827
    %v833 = vrsqrt.pop %v828
    %v834 = vrsqrt.pop %v829
    %v835 = vrsqrt.pop %v830
    %v836 = vmul.f32 %v796, %v831
    %v837 = vmul.f32 %v797, %v832
    %v838 = vmul.f32 %v798, %v833
    %v839 = vmul.f32 %v799, %v834
    %v840 = vmul.f32 %v800, %v835
    %v841 = vlaneseq
    %v842 = vshrl.u32 %v841, 7
    %v843 = vsub.s32 1, %v842
    %v844 = vrot.slane %v119, %v843
    %v845 = vmul.f32 %v836, %v844
    %v846 = vmul.f32 %v837, %v844
    %v847 = vmul.f32 %v838, %v844
    %v848 = vmul.f32 %v839, %v844
    %v849 = vmul.f32 %v840, %v844
    %v850 = vlaneseq
    %v851 = vshrl.u32 %v850, 7
    %v852 = vsub.s32 2, %v851
    %v853 = vrot.slane %v119, %v852
    %v854 = vadd.f32 %v845, %v853
    %v855 = vadd.f32 %v846, %v853
    %v856 = vadd.f32 %v847, %v853
    %v857 = vadd.f32 %v848, %v853
    %v858 = vadd.f32 %v849, %v853
    %v859 = vpack.c.bf16 %v855, %v854
    %v860 = vpack.c.bf16 %v857, %v856
    %v861 = vpack.c.bf16 %v858, %v858
    %v862 = vld [vmem:[%s6] sm:$0xf]
    %v863 = vld [vmem:[%s6 + $0x4] sm:$0xf]
    %v864 = vld [vmem:[%s6 + $0x8] sm:$0xf]
    %v865 = vld [vmem:[%s6 + $0xc] sm:$0xf]
    %v866 = vld [vmem:[#allocation7] sm:$0x1]
    %v868 = vlaneseq
    %v869 = vshrl.u32 %v868, 7
    %v870 = vsub.s32 0, %v869
    %v871 = vrot.slane %v866, %v870
    %v877 = vunpack.c.l.b16 %v862
    %v878 = vunpack.c.l.b16 %v863
    %v879 = vunpack.c.l.b16 %v864
    %v880 = vunpack.c.l.b16 %v865
    %v881 = vpack.c.b16 %v878, %v877
    %v882 = vpack.c.b16 %v880, %v879
    %v886 = vsel %vm146, %v859, 0
    %v889 = vsel %vm146, %v860, 0
    %v892 = vsel %vm146, %v861, 0
    %894 = vmatprep.subr.bf16.mxu0 0
    %895 = vmatpush1.bf16.msra.mxu0 0
    %896 = vmatprep.subr.bf16.mxu0 0
    %897 = vmatpush1.bf16.msra.mxu0 0
    %898 = vmatprep.subr.bf16.mxu0 0
    %899 = vmatpush1.bf16.msra.mxu0 0
    %900 = vmatprep.subr.bf16.mxu0 0
    %901 = vmatpush1.bf16.msra.mxu0 0
    %902 = vmatprep.subr.bf16.mxu0 0
    %903 = vmatpush1.bf16.msra.mxu0 0
    %904 = vmatprep.subr.bf16.mxu0 0
    %905 = vmatpush1.bf16.msra.mxu0 0
    %906 = vmatprep.subr.bf16.mxu0 0
    %907 = vmatpush1.bf16.msra.mxu0 %v882
    %908 = vmatprep.subr.bf16.mxu0 0
    %909 = vmatpush1.bf16.msra.mxu0 %v881
    %910 = vmatprep.subr.bf16.mxu0 0
    %911 = vmatpush2.bf16.msra.mxu0 0
    %912 = vmatprep.subr.bf16.mxu0 0
    %913 = vmatpush2.bf16.msra.mxu0 0
    %914 = vmatprep.subr.bf16.mxu0 0
    %915 = vmatpush2.bf16.msra.mxu0 0
    %916 = vmatprep.subr.bf16.mxu0 0
    %917 = vmatpush2.bf16.msra.mxu0 0
    %918 = vmatprep.subr.bf16.mxu0 0
    %919 = vmatpush2.bf16.msra.mxu0 0
    %920 = vmatprep.subr.bf16.mxu0 0
    %921 = vmatpush2.bf16.msra.mxu0 0
    %922 = vmatprep.subr.bf16.mxu0 0
    %923 = vmatpush2.bf16.msra.mxu0 0
    %924 = vmatprep.subr.bf16.mxu0 0
    %925 = vmatpush2.bf16.msra.mxu0 0
    %926 = vmatprep.mubr.bf16.mxu0 0
    %927 = vmatmul.mubr.bf16.gmra.mxu0 %v886
    %v928 = vpop.f32.mrf.mxu0
    %v929 = vadd.f32 %v871, %v928
    %v930 = vpop.f32.mrf.mxu0
    %v931 = vpop.f32.mrf.mxu0
    %v932 = vadd.f32 %v871, %v931
    %v933 = vpop.f32.mrf.mxu0
    %934 = vmatprep.mubr.bf16.mxu0 0
    %935 = vmatmul.mubr.bf16.gmra.mxu0 %v889
    %v936 = vpop.f32.mrf.mxu0
    %v937 = vadd.f32 %v871, %v936
    %v938 = vpop.f32.mrf.mxu0
    %v939 = vpop.f32.mrf.mxu0
    %v940 = vadd.f32 %v871, %v939
    %v941 = vpop.f32.mrf.mxu0
    %942 = vmatprep.mubr.bf16.mxu0 0
    %943 = vmatmul.mubr.bf16.gmra.mxu0 %v892
    %v944 = vpop.f32.mrf.mxu0
    %v945 = vadd.f32 %v871, %v944
    %v946 = vpop.f32.mrf.mxu0
    %v947 = vpop.f32.mrf.mxu0
    %v948 = vpop.f32.mrf.mxu0
    %949 = vdwg.mxu0
    %v950 = vmul.f32 %v929, %v929
    %v951 = vmul.f32 %v932, %v932
    %v952 = vmul.f32 %v937, %v937
    %v953 = vmul.f32 %v940, %v940
    %v954 = vmul.f32 %v945, %v945
    %v955 = vmul.f32 %v929, %v950
    %v956 = vmul.f32 %v932, %v951
    %v957 = vmul.f32 %v937, %v952
    %v958 = vmul.f32 %v940, %v953
    %v959 = vmul.f32 %v945, %v954
    %v960 = vmul.f32 %v955, 0.044715
    %v961 = vmul.f32 %v956, 0.044715
    %v962 = vmul.f32 %v957, 0.044715
    %v963 = vmul.f32 %v958, 0.044715
    %v964 = vmul.f32 %v959, 0.044715
    %v965 = vadd.f32 %v929, %v960
    %v966 = vadd.f32 %v932, %v961
    %v967 = vadd.f32 %v937, %v962
    %v968 = vadd.f32 %v940, %v963
    %v969 = vadd.f32 %v945, %v964
    %v970 = vmul.f32 %v965, 0.7978846
    %v971 = vmul.f32 %v966, 0.7978846
    %v972 = vmul.f32 %v967, 0.7978846
    %v973 = vmul.f32 %v968, 0.7978846
    %v974 = vmul.f32 %v969, 0.7978846
    %v975 = vtanh.pop %v970
    %v976 = vtanh.pop %v971
    %v977 = vtanh.pop %v972
    %v978 = vtanh.pop %v973
    %v979 = vtanh.pop %v974
    %v980 = vadd.f32 %v975, 1.0
    %v981 = vadd.f32 %v976, 1.0
    %v982 = vadd.f32 %v977, 1.0
    %v983 = vadd.f32 %v978, 1.0
    %v984 = vadd.f32 %v979, 1.0
    %v985 = vmul.f32 %v980, 0.5
    %v986 = vmul.f32 %v981, 0.5
    %v987 = vmul.f32 %v982, 0.5
    %v988 = vmul.f32 %v983, 0.5
    %v989 = vmul.f32 %v984, 0.5
    %v990 = vmul.f32 %v929, %v985
    %v991 = vmul.f32 %v932, %v986
    %v992 = vmul.f32 %v937, %v987
    %v993 = vmul.f32 %v940, %v988
    %v994 = vmul.f32 %v945, %v989
    %v995 = vpack.c.bf16 %v991, %v990
    %v996 = vpack.c.bf16 %v993, %v992
    %v997 = vpack.c.bf16 %v994, %v994
    %v998 = vld [vmem:[%s8] sm:$0xf]
    %v999 = vld [vmem:[%s8 + $0x4] sm:$0xf]
    %v1000 = vld [vmem:[%s8 + $0x8] sm:$0xf]
    %v1001 = vld [vmem:[%s8 + $0xc] sm:$0xf]
    %v1002 = vld [vmem:[%s8 + $0x10] sm:$0xf]
    %v1003 = vld [vmem:[%s8 + $0x14] sm:$0xf]
    %v1004 = vld [vmem:[%s8 + $0x18] sm:$0xf]
    %v1005 = vld [vmem:[%s8 + $0x1c] sm:$0xf]
    %v1006 = vlaneseq
    %v1007 = vshrl.u32 %v1006, 7
    %v1008 = vsub.s32 3, %v1007
    %v1009 = vrot.slane %v119, %v1008
    %v1018 = vunpack.c.l.b16 %v998
    %v1019 = vunpack.c.l.b16 %v999
    %v1020 = vunpack.c.l.b16 %v1000
    %v1021 = vunpack.c.l.b16 %v1001
    %v1022 = vunpack.c.l.b16 %v1002
    %v1023 = vunpack.c.l.b16 %v1003
    %v1024 = vunpack.c.l.b16 %v1004
    %v1025 = vunpack.c.l.b16 %v1005
    %v1026 = vpack.c.b16 %v1019, %v1018
    %v1027 = vpack.c.b16 %v1021, %v1020
    %v1028 = vpack.c.b16 %v1023, %v1022
    %v1029 = vpack.c.b16 %v1025, %v1024
    %vm1034 = vcmask 523264
    %v1036 = vsel %vm1034, %v995, 0
    %v1039 = vsel %vm1034, %v996, 0
    %v1042 = vsel %vm1034, %v997, 0
    %1044 = vmatprep.subr.bf16.mxu0 0
    %1045 = vmatpush1.bf16.msra.mxu0 0
    %1046 = vmatprep.subr.bf16.mxu0 0
    %1047 = vmatpush1.bf16.msra.mxu0 0
    %1048 = vmatprep.subr.bf16.mxu0 0
    %1049 = vmatpush1.bf16.msra.mxu0 0
    %1050 = vmatprep.subr.bf16.mxu0 0
    %1051 = vmatpush1.bf16.msra.mxu0 0
    %1052 = vmatprep.subr.bf16.mxu0 0
    %1053 = vmatpush1.bf16.msra.mxu0 %v1029
    %1054 = vmatprep.subr.bf16.mxu0 0
    %1055 = vmatpush1.bf16.msra.mxu0 %v1028
    %1056 = vmatprep.subr.bf16.mxu0 0
    %1057 = vmatpush1.bf16.msra.mxu0 %v1027
    %1058 = vmatprep.subr.bf16.mxu0 0
    %1059 = vmatpush1.bf16.msra.mxu0 %v1026
    %1060 = vmatprep.subr.bf16.mxu0 0
    %1061 = vmatpush2.bf16.msra.mxu0 0
    %1062 = vmatprep.subr.bf16.mxu0 0
    %1063 = vmatpush2.bf16.msra.mxu0 0
    %1064 = vmatprep.subr.bf16.mxu0 0
    %1065 = vmatpush2.bf16.msra.mxu0 0
    %1066 = vmatprep.subr.bf16.mxu0 0
    %1067 = vmatpush2.bf16.msra.mxu0 0
    %1068 = vmatprep.subr.bf16.mxu0 0
    %1069 = vmatpush2.bf16.msra.mxu0 0
    %1070 = vmatprep.subr.bf16.mxu0 0
    %1071 = vmatpush2.bf16.msra.mxu0 0
    %1072 = vmatprep.subr.bf16.mxu0 0
    %1073 = vmatpush2.bf16.msra.mxu0 0
    %1074 = vmatprep.subr.bf16.mxu0 0
    %1075 = vmatpush2.bf16.msra.mxu0 0
    %1076 = vmatprep.mubr.bf16.mxu0 0
    %1077 = vmatmul.mubr.bf16.gmra.mxu0 %v1036
    %v1078 = vpop.f32.mrf.mxu0
    %v1079 = vadd.f32 %v1009, %v1078
    %v1080 = vpop.f32.mrf.mxu0
    %v1081 = vpop.f32.mrf.mxu0
    %v1082 = vadd.f32 %v1009, %v1081
    %v1083 = vpop.f32.mrf.mxu0
    %1084 = vmatprep.mubr.bf16.mxu0 0
    %1085 = vmatmul.mubr.bf16.gmra.mxu0 %v1039
    %v1086 = vpop.f32.mrf.mxu0
    %v1087 = vadd.f32 %v1009, %v1086
    %v1088 = vpop.f32.mrf.mxu0
    %v1089 = vpop.f32.mrf.mxu0
    %v1090 = vadd.f32 %v1009, %v1089
    %v1091 = vpop.f32.mrf.mxu0
    %1092 = vmatprep.mubr.bf16.mxu0 0
    %1093 = vmatmul.mubr.bf16.gmra.mxu0 %v1042
    %v1094 = vpop.f32.mrf.mxu0
    %v1095 = vadd.f32 %v1009, %v1094
    %v1096 = vpop.f32.mrf.mxu0
    %v1097 = vpop.f32.mrf.mxu0
    %v1098 = vpop.f32.mrf.mxu0
    %1099 = vdwg.mxu0
    %v1100 = vadd.f32 %v854, %v1079
    %v1101 = vadd.f32 %v855, %v1082
    %v1102 = vadd.f32 %v856, %v1087
    %v1103 = vadd.f32 %v857, %v1090
    %v1104 = vadd.f32 %v858, %v1095
    %v1105 = vsel %vm146, %v1100, 0.0
    %1106 = vadd.xlane.f32.xlu0 %v1105
    %v1107 = vpop.xlane.xlu0 %1106
    %v1108 = vsel %vm146, %v1101, 0.0
    %1109 = vadd.xlane.f32.xlu0 %v1108
    %v1110 = vpop.xlane.xlu0 %1109
    %v1111 = vsel %vm146, %v1102, 0.0
    %1112 = vadd.xlane.f32.xlu0 %v1111
    %v1113 = vpop.xlane.xlu0 %1112
    %v1114 = vsel %vm146, %v1103, 0.0
    %1115 = vadd.xlane.f32.xlu0 %v1114
    %v1116 = vpop.xlane.xlu0 %1115
    %v1117 = vsel %vm786, %v1104, 0.0
    %1118 = vadd.xlane.f32.xlu0 %v1117
    %v1119 = vpop.xlane.xlu0 %1118
    %v1120 = vmul.f32 %v1107, %v790
    %v1121 = vmul.f32 %v1110, %v790
    %v1122 = vmul.f32 %v1113, %v790
    %v1123 = vmul.f32 %v1116, %v790
    %v1124 = vmul.f32 %v1119, %v790
    %v1125 = vsub.f32 %v1100, %v1120
    %v1126 = vsub.f32 %v1101, %v1121
    %v1127 = vsub.f32 %v1102, %v1122
    %v1128 = vsub.f32 %v1103, %v1123
    %v1129 = vsub.f32 %v1104, %v1124
    %v1130 = vmul.f32 %v1125, %v1125
    %v1131 = vmul.f32 %v1126, %v1126
    %v1132 = vmul.f32 %v1127, %v1127
    %v1133 = vmul.f32 %v1128, %v1128
    %v1134 = vmul.f32 %v1129, %v1129
    %v1135 = vsel %vm146, %v1130, 0.0
    %1136 = vadd.xlane.f32.xlu0 %v1135
    %v1137 = vpop.xlane.xlu0 %1136
    %v1138 = vsel %vm146, %v1131, 0.0
    %1139 = vadd.xlane.f32.xlu0 %v1138
    %v1140 = vpop.xlane.xlu0 %1139
    %v1141 = vsel %vm146, %v1132, 0.0
    %1142 = vadd.xlane.f32.xlu0 %v1141
    %v1143 = vpop.xlane.xlu0 %1142
    %v1144 = vsel %vm146, %v1133, 0.0
    %1145 = vadd.xlane.f32.xlu0 %v1144
    %v1146 = vpop.xlane.xlu0 %1145
    %v1147 = vsel %vm786, %v1134, 0.0
    %1148 = vadd.xlane.f32.xlu0 %v1147
    %v1149 = vpop.xlane.xlu0 %1148
    %v1150 = vmul.f32 %v1137, %v790
    %v1151 = vmul.f32 %v1140, %v790
    %v1152 = vmul.f32 %v1143, %v790
    %v1153 = vmul.f32 %v1146, %v790
    %v1154 = vmul.f32 %v1149, %v790
    %v1155 = vadd.f32 %v1150, 1e-12
    %v1156 = vadd.f32 %v1151, 1e-12
    %v1157 = vadd.f32 %v1152, 1e-12
    %v1158 = vadd.f32 %v1153, 1e-12
    %v1159 = vadd.f32 %v1154, 1e-12
    %v1160 = vrsqrt.pop %v1155
    %v1161 = vrsqrt.pop %v1156
    %v1162 = vrsqrt.pop %v1157
    %v1163 = vrsqrt.pop %v1158
    %v1164 = vrsqrt.pop %v1159
    %v1165 = vmul.f32 %v1125, %v1160
    %v1166 = vmul.f32 %v1126, %v1161
    %v1167 = vmul.f32 %v1127, %v1162
    %v1168 = vmul.f32 %v1128, %v1163
    %v1169 = vmul.f32 %v1129, %v1164
    %v1170 = vlaneseq
    %v1171 = vshrl.u32 %v1170, 7
    %v1172 = vsub.s32 4, %v1171
    %v1173 = vrot.slane %v119, %v1172
    %v1174 = vmul.f32 %v1165, %v1173
    %v1175 = vmul.f32 %v1166, %v1173
    %v1176 = vmul.f32 %v1167, %v1173
    %v1177 = vmul.f32 %v1168, %v1173
    %v1178 = vmul.f32 %v1169, %v1173
    %v1179 = vlaneseq
    %v1180 = vshrl.u32 %v1179, 7
    %v1181 = vsub.s32 5, %v1180
    %v1182 = vrot.slane %v119, %v1181
    %v1183 = vadd.f32 %v1174, %v1182
    %v1184 = vadd.f32 %v1175, %v1182
    %v1185 = vadd.f32 %v1176, %v1182
    %v1186 = vadd.f32 %v1177, %v1182
    %v1187 = vadd.f32 %v1178, %v1182
    %v1188 = vpack.c.bf16 %v1184, %v1183
    %v1189 = vpack.c.bf16 %v1186, %v1185
    %v1190 = vpack.c.bf16 %v1187, %v1187
    %v1191 = vld [vmem:[%s9] sm:$0xf]
    %v1192 = vld [vmem:[%s9 + $0x4] sm:$0xf]
    %v1193 = vld [vmem:[%s9 + $0x8] sm:$0xf]
    %v1194 = vld [vmem:[%s9 + $0xc] sm:$0xf]
    %v1199 = vunpack.c.l.b16 %v1191
    %v1200 = vunpack.c.l.b16 %v1192
    %v1201 = vunpack.c.l.b16 %v1193
    %v1202 = vunpack.c.l.b16 %v1194
    %v1203 = vpack.c.b16 %v1200, %v1199
    %v1204 = vpack.c.b16 %v1202, %v1201
    %v1208 = vsel %vm146, %v1188, 0
    %v1211 = vsel %vm146, %v1189, 0
    %v1214 = vsel %vm146, %v1190, 0
    %1216 = vmatprep.subr.bf16.mxu0 0
    %1217 = vmatpush1.bf16.msra.mxu0 0
    %1218 = vmatprep.subr.bf16.mxu0 0
    %1219 = vmatpush1.bf16.msra.mxu0 0
    %1220 = vmatprep.subr.bf16.mxu0 0
    %1221 = vmatpush1.bf16.msra.mxu0 0
    %1222 = vmatprep.subr.bf16.mxu0 0
    %1223 = vmatpush1.bf16.msra.mxu0 0
    %1224 = vmatprep.subr.bf16.mxu0 0
    %1225 = vmatpush1.bf16.msra.mxu0 0
    %1226 = vmatprep.subr.bf16.mxu0 0
    %1227 = vmatpush1.bf16.msra.mxu0 0
    %1228 = vmatprep.subr.bf16.mxu0 0
    %1229 = vmatpush1.bf16.msra.mxu0 %v1204
    %1230 = vmatprep.subr.bf16.mxu0 0
    %1231 = vmatpush1.bf16.msra.mxu0 %v1203
    %1232 = vmatprep.subr.bf16.mxu0 0
    %1233 = vmatpush2.bf16.msra.mxu0 0
    %1234 = vmatprep.subr.bf16.mxu0 0
    %1235 = vmatpush2.bf16.msra.mxu0 0
    %1236 = vmatprep.subr.bf16.mxu0 0
    %1237 = vmatpush2.bf16.msra.mxu0 0
    %1238 = vmatprep.subr.bf16.mxu0 0
    %1239 = vmatpush2.bf16.msra.mxu0 0
    %1240 = vmatprep.subr.bf16.mxu0 0
    %1241 = vmatpush2.bf16.msra.mxu0 0
    %1242 = vmatprep.subr.bf16.mxu0 0
    %1243 = vmatpush2.bf16.msra.mxu0 0
    %1244 = vmatprep.subr.bf16.mxu0 0
    %1245 = vmatpush2.bf16.msra.mxu0 0
    %1246 = vmatprep.subr.bf16.mxu0 0
    %1247 = vmatpush2.bf16.msra.mxu0 0
    %1248 = vmatprep.mubr.bf16.mxu0 0
    %1249 = vmatmul.mubr.bf16.gmra.mxu0 %v1208
    %v1250 = vpop.f32.mrf.mxu0
    %v1251 = vadd.f32 0.0, %v1250
    %v1252 = vpop.f32.mrf.mxu0
    %v1253 = vpop.f32.mrf.mxu0
    %v1254 = vadd.f32 0.0, %v1253
    %v1255 = vpop.f32.mrf.mxu0
    %1256 = vmatprep.mubr.bf16.mxu0 0
    %1257 = vmatmul.mubr.bf16.gmra.mxu0 %v1211
    %v1258 = vpop.f32.mrf.mxu0
    %v1259 = vadd.f32 0.0, %v1258
    %v1260 = vpop.f32.mrf.mxu0
    %v1261 = vpop.f32.mrf.mxu0
    %v1262 = vadd.f32 0.0, %v1261
    %v1263 = vpop.f32.mrf.mxu0
    %1264 = vmatprep.mubr.bf16.mxu0 0
    %1265 = vmatmul.mubr.bf16.gmra.mxu0 %v1214
    %v1266 = vpop.f32.mrf.mxu0
    %v1267 = vadd.f32 0.0, %v1266
    %v1268 = vpop.f32.mrf.mxu0
    %v1269 = vpop.f32.mrf.mxu0
    %v1270 = vpop.f32.mrf.mxu0
    %1271 = vdwg.mxu0
    %v1272 = vld [vmem:[#allocation10] sm:$0xff]
    %v1273 = vld [vmem:[#allocation10 + $0x8] sm:$0xff]
    %v1274 = vld [vmem:[#allocation8] sm:$0x1]
    %v1276 = vlaneseq
    %v1277 = vshrl.u32 %v1276, 7
    %v1278 = vsub.s32 0, %v1277
    %v1279 = vrot.slane %v1274, %v1278
    %v1282 = vsel %vm299, %v1272, 0
    %v1285 = vsel %vm299, %v1273, 0
    %vm1287 = vcmask 1043456
    %v1289 = vsel %vm1287, %v1267, 0
    %1291 = vmatprep.subr.mxu0 0.0
    %1292 = vmatpush1.msra.mxu0 0.0
    %1293 = vmatprep.subr.mxu0 0.0
    %1294 = vmatpush1.msra.mxu0 0.0
    %1295 = vmatprep.subr.mxu0 0.0
    %1296 = vmatpush1.msra.mxu0 0.0
    %1297 = vmatprep.subr.mxu0 0.0
    %1298 = vmatpush1.msra.mxu0 0.0
    %1299 = vmatprep.subr.mxu0 0.0
    %1300 = vmatpush1.msra.mxu0 0.0
    %1301 = vmatprep.subr.mxu0 0.0
    %1302 = vmatpush1.msra.mxu0 0.0
    %1303 = vmatprep.subr.mxu0 0.0
    %1304 = vmatpush1.msra.mxu0 0.0
    %1305 = vmatprep.subr.mxu0 0.0
    %1306 = vmatpush1.msra.mxu0 0.0
    %1307 = vmatprep.subr.mxu0 0.0
    %1308 = vmatpush1.msra.mxu0 0.0
    %1309 = vmatprep.subr.mxu0 0.0
    %1310 = vmatpush1.msra.mxu0 0.0
    %1311 = vmatprep.subr.mxu0 0.0
    %1312 = vmatpush1.msra.mxu0 0.0
    %1313 = vmatprep.subr.mxu0 0.0
    %1314 = vmatpush1.msra.mxu0 %v1289
    %1315 = vmatprep.subr.mxu0 0.0
    %1316 = vmatpush1.msra.mxu0 %v1262
    %1317 = vmatprep.subr.mxu0 0.0
    %1318 = vmatpush1.msra.mxu0 %v1259
    %1319 = vmatprep.subr.mxu0 0.0
    %1320 = vmatpush1.msra.mxu0 %v1254
    %1321 = vmatprep.subr.mxu0 0.0
    %1322 = vmatpush1.msra.mxu0 %v1251
    %1323 = vmatprep.subr.mxu0 0.0
    %1324 = vmatpush2.msra.mxu0 0.0
    %1325 = vmatprep.subr.mxu0 0.0
    %1326 = vmatpush2.msra.mxu0 0.0
    %1327 = vmatprep.subr.mxu0 0.0
    %1328 = vmatpush2.msra.mxu0 0.0
    %1329 = vmatprep.subr.mxu0 0.0
    %1330 = vmatpush2.msra.mxu0 0.0
    %1331 = vmatprep.subr.mxu0 0.0
    %1332 = vmatpush2.msra.mxu0 0.0
    %1333 = vmatprep.subr.mxu0 0.0
    %1334 = vmatpush2.msra.mxu0 0.0
    %1335 = vmatprep.subr.mxu0 0.0
    %1336 = vmatpush2.msra.mxu0 0.0
    %1337 = vmatprep.subr.mxu0 0.0
    %1338 = vmatpush2.msra.mxu0 0.0
    %1339 = vmatprep.subr.mxu0 0.0
    %1340 = vmatpush2.msra.mxu0 0.0
    %1341 = vmatprep.subr.mxu0 0.0
    %1342 = vmatpush2.msra.mxu0 0.0
    %1343 = vmatprep.subr.mxu0 0.0
    %1344 = vmatpush2.msra.mxu0 0.0
    %1345 = vmatprep.subr.mxu0 0.0
    %1346 = vmatpush2.msra.mxu0 0.0
    %1347 = vmatprep.subr.mxu0 0.0
    %1348 = vmatpush2.msra.mxu0 0.0
    %1349 = vmatprep.subr.mxu0 0.0
    %1350 = vmatpush2.msra.mxu0 0.0
    %1351 = vmatprep.subr.mxu0 0.0
    %1352 = vmatpush2.msra.mxu0 0.0
    %1353 = vmatprep.subr.mxu0 0.0
    %1354 = vmatpush2.msra.mxu0 0.0
    %1355 = vmatprep.mubr.f32.mxu0 0.0
    %1356 = vmatmul.mubr.f32.gmra.mxu0 %v1282
    %v1357 = vpop.f32.mrf.mxu0
    %v1358 = vadd.f32 %v1279, %v1357
    %v1359 = vpop.f32.mrf.mxu0
    %1360 = vmatprep.mubr.f32.mxu0 0.0
    %1361 = vmatmul.mubr.f32.gmra.mxu0 %v1285
    %v1362 = vpop.f32.mrf.mxu0
    %v1363 = vadd.f32 %v1279, %v1362
    %v1364 = vpop.f32.mrf.mxu0
    %1365 = vdwg.mxu0
    %vm1366 = vcmask 392192
    %1367 = vst.msk [vmem:[#allocation11] sm:$0xff] %vm1366, %v1358
    %1368 = vst.msk [vmem:[#allocation11 + $0x8] sm:$0xff] %vm1366, %v1363
    %v1369 = vld [vmem:[%s12] sm:$0x3]
    %v1371 = vsel %vm299, %v1369, 0
    %v1374 = vsel %vm1287, %v1187, 0
    %1376 = vmatprep.subr.mxu0 0.0
    %1377 = vmatpush1.msra.mxu0 0.0
    %1378 = vmatprep.subr.mxu0 0.0
    %1379 = vmatpush1.msra.mxu0 0.0
    %1380 = vmatprep.subr.mxu0 0.0
    %1381 = vmatpush1.msra.mxu0 0.0
    %1382 = vmatprep.subr.mxu0 0.0
    %1383 = vmatpush1.msra.mxu0 0.0
    %1384 = vmatprep.subr.mxu0 0.0
    %1385 = vmatpush1.msra.mxu0 0.0
    %1386 = vmatprep.subr.mxu0 0.0
    %1387 = vmatpush1.msra.mxu0 0.0
    %1388 = vmatprep.subr.mxu0 0.0
    %1389 = vmatpush1.msra.mxu0 0.0
    %1390 = vmatprep.subr.mxu0 0.0
    %1391 = vmatpush1.msra.mxu0 0.0
    %1392 = vmatprep.subr.mxu0 0.0
    %1393 = vmatpush1.msra.mxu0 0.0
    %1394 = vmatprep.subr.mxu0 0.0
    %1395 = vmatpush1.msra.mxu0 0.0
    %1396 = vmatprep.subr.mxu0 0.0
    %1397 = vmatpush1.msra.mxu0 0.0
    %1398 = vmatprep.subr.mxu0 0.0
    %1399 = vmatpush1.msra.mxu0 %v1374
    %1400 = vmatprep.subr.mxu0 0.0
    %1401 = vmatpush1.msra.mxu0 %v1186
    %1402 = vmatprep.subr.mxu0 0.0
    %1403 = vmatpush1.msra.mxu0 %v1185
    %1404 = vmatprep.subr.mxu0 0.0
    %1405 = vmatpush1.msra.mxu0 %v1184
    %1406 = vmatprep.subr.mxu0 0.0
    %1407 = vmatpush1.msra.mxu0 %v1183
    %1408 = vmatprep.subr.mxu0 0.0
    %1409 = vmatpush2.msra.mxu0 0.0
    %1410 = vmatprep.subr.mxu0 0.0
    %1411 = vmatpush2.msra.mxu0 0.0
    %1412 = vmatprep.subr.mxu0 0.0
    %1413 = vmatpush2.msra.mxu0 0.0
    %1414 = vmatprep.subr.mxu0 0.0
    %1415 = vmatpush2.msra.mxu0 0.0
    %1416 = vmatprep.subr.mxu0 0.0
    %1417 = vmatpush2.msra.mxu0 0.0
    %1418 = vmatprep.subr.mxu0 0.0
    %1419 = vmatpush2.msra.mxu0 0.0
    %1420 = vmatprep.subr.mxu0 0.0
    %1421 = vmatpush2.msra.mxu0 0.0
    %1422 = vmatprep.subr.mxu0 0.0
    %1423 = vmatpush2.msra.mxu0 0.0
    %1424 = vmatprep.subr.mxu0 0.0
    %1425 = vmatpush2.msra.mxu0 0.0
    %1426 = vmatprep.subr.mxu0 0.0
    %1427 = vmatpush2.msra.mxu0 0.0
    %1428 = vmatprep.subr.mxu0 0.0
    %1429 = vmatpush2.msra.mxu0 0.0
    %1430 = vmatprep.subr.mxu0 0.0
    %1431 = vmatpush2.msra.mxu0 0.0
    %1432 = vmatprep.subr.mxu0 0.0
    %1433 = vmatpush2.msra.mxu0 0.0
    %1434 = vmatprep.subr.mxu0 0.0
    %1435 = vmatpush2.msra.mxu0 0.0
    %1436 = vmatprep.subr.mxu0 0.0
    %1437 = vmatpush2.msra.mxu0 0.0
    %1438 = vmatprep.subr.mxu0 0.0
    %1439 = vmatpush2.msra.mxu0 0.0
    %1440 = vmatprep.mubr.f32.mxu0 0.0
    %1441 = vmatmul.mubr.f32.gmra.mxu0 %v1371
    %v1442 = vpop.f32.mrf.mxu0
    %v1443 = vadd.f32 0.0, %v1442
    %v1444 = vpop.f32.mrf.mxu0
    %1445 = vdwg.mxu0
    %vm1446 = vcmask 254976
    %1447 = vst.msk [vmem:[#allocation12] sm:$0x3] %vm1446, %v1443
    // Predicated region
    $region74: #{tpu_custom_call.1} parent=1 // pred_check
      _
    $region75: #{tpu_custom_call.1} parent=1 // pred_check_branch
      %1449 = sbr.rel (0) target = $region77
    $region76: #{tpu_custom_call.1} parent=1 // pred_region
      %s1451 = ssub.s32 256, 256
      %1452 = vsyncadd [#allocation4], %s1451
      %s1453 = sshll.u32 [#allocation11], 4
      %s1454 = int_to_ptr.vmem [resolvable:$true] %s1453
      %1459 = dma.vmem_to_hbm [thread:$0]  %s1454, 256, %s13, [#allocation4], 128, 128, 8
    $region77: #{tpu_custom_call.1} parent=1 // pred_fallthru
      _
    // Predicated region
    $region78: #{tpu_custom_call.1} parent=1 // pred_check
      _
    $region79: #{tpu_custom_call.1} parent=1 // pred_check_branch
      %1461 = sbr.rel (0) target = $region81
    $region80: #{tpu_custom_call.1} parent=1 // pred_region
      %s1463 = ssub.s32 32, 32
      %1464 = vsyncadd [#allocation13], %s1463
      %s1466 = sshll.u32 [#allocation12], 4
      %s1467 = int_to_ptr.vmem [resolvable:$true] %s1466
      %1469 = dma.vmem_to_hbm [thread:$0]  %s1467, 32, %s14, [#allocation13]
    $region81: #{tpu_custom_call.1} parent=1 // pred_fallthru
      _
    // Predicated region
    $region82: #{tpu_custom_call.1} parent=1 // pred_check
      _
    $region83: #{tpu_custom_call.1} parent=1 // pred_check_branch
      %1471 = sbr.rel (0) target = $region85
    $region84: #{tpu_custom_call.1} parent=1 // pred_region
      %1472 = dma.done [#allocation4], 256
    $region85: #{tpu_custom_call.1} parent=1 // pred_fallthru
      _
    // Predicated region
    $region86: #{tpu_custom_call.1} parent=1 // pred_check
      _
    $region87: #{tpu_custom_call.1} parent=1 // pred_check_branch
      %1474 = sbr.rel (0) target = $region89
    $region88: #{tpu_custom_call.1} parent=1 // pred_region
      %1475 = dma.done [#allocation13], 32
    $region89: #{tpu_custom_call.1} parent=1 // pred_fallthru
      _
    %1476 = vsyncpa [#allocation3], 1
    %1477 = vsyncpa [#allocation6], 1
    %1478 = vsyncpa [#allocation9], 1
    %1479 = vsyncpa [#allocation4], 1
    %1480 = vsyncpa [#allocation13], 1

</llo_original>
